<compile_context>
chip_gen: v7x
topology: tpu7x:2x2x1
jax: 0.10.0
libtpu: 0.0.40
codegen_flags: <defaults>
</compile_context>

<pallas_src>
import functools

import jax
import jax.numpy as jnp
from jax.experimental import pallas as pl
from jax.experimental.pallas import tpu as pltpu

EMB_DIM = 300                       # flair WordEmbeddings('en-news') length
HALF_DIM = 2 * EMB_DIM              # packed (mention||context) / (label||description)
IN_DIM = 4 * EMB_DIM
H1, H2, OUT = 256, 64, 1
DEFAULT_TILE_B = 1024               # sweep 1024 / 2048


def _round_up(x, m):
    return ((x + m - 1) // m) * m


def _choose_tile_b(b):
    """Sublane-aligned batch tile, capped, and (for b > 16) guaranteeing at
    least 2 grid steps so the 'parallel' batch axis can shard across both v7x
    TensorCores (irrelevant but harmless on single-TC v5e/v6e)."""
    if b <= 16:
        return _round_up(max(b, 8), 8)
    half = _round_up(pl.cdiv(b, 2), 8)
    return min(DEFAULT_TILE_B, half)


@functools.lru_cache(maxsize=None)
def _vmem_limit_bytes():
    # Generation-aware scoped-VMEM limit: ~3/4 of physical, capped at 64 MiB
    # (v7x: 64 MiB physical -> 48 MiB; v5e/v6e: 128 MiB physical -> 64 MiB).
    cap = 128 * 1024 * 1024
    try:
        cap = int(getattr(pltpu.get_tpu_info(), "vmem_capacity_bytes", cap))
    except Exception:  # non-TPU / interpret backends
        pass
    return int(min(cap * 3 // 4, 64 * 1024 * 1024))


def _weight_bytes():
    return (2 * HALF_DIM * H1 * 2        # w1_mc, w1_ld (bf16)
            + H1 * H2 * 2                # w2 (bf16)
            + (H1 + H2 + H2 + 1) * 4)    # b1, b2, w3_row, b3 (f32)


# ----------------------------------------------------------------------------
# Kernel bodies
# ----------------------------------------------------------------------------
def _dot_f32(a, b):
    return jnp.dot(a, b, preferred_element_type=jnp.float32)


def _head(pre1, w2, b2, w3_row, b3):
    """ReLU -> Linear(256,64) -> ReLU -> Linear(64,1) (VPU reduce) -> Tanh."""
    h1 = jnp.maximum(pre1, 0.0)                                   # f32
    h2 = jnp.maximum(_dot_f32(h1.astype(jnp.bfloat16), w2) + b2, 0.0)
    # N=1 final layer off the MXU: elementwise multiply + lane reduce.
    return jnp.tanh(jnp.sum(h2 * w3_row, axis=-1, keepdims=True) + b3)


def ranknet_forward_kernel(mc_ref, ld_ref,
                           w1mc_ref, w1ld_ref, b1_ref,
                           w2_ref, b2_ref, w3_ref, b3_ref,
                           o_ref):
    bf16 = jnp.bfloat16
    # .astype is a no-op when the producer already feeds bf16 (intended path).
    pre1 = (_dot_f32(mc_ref[...].astype(bf16), w1mc_ref[...])
            + _dot_f32(ld_ref[...].astype(bf16), w1ld_ref[...])
            + b1_ref[...])
    s = _head(pre1, w2_ref[...], b2_ref[...], w3_ref[...], b3_ref[0, 0])
    o_ref[...] = s.astype(o_ref.dtype)


def ranknet_score_pair_kernel(mc_ref, ldp_ref, ldn_ref,
                              w1mc_ref, w1ld_ref, b1_ref,
                              w2_ref, b2_ref, w3_ref, b3_ref,
                              o_ref):
    bf16 = jnp.bfloat16
    # Mention/context contribution to layer 1 is shared between the positive
    # and negative passes: compute once (~33% fewer MXU flops, halves the
    # mention/context HBM reads vs two forward() calls).
    shared = _dot_f32(mc_ref[...].astype(bf16), w1mc_ref[...]) + b1_ref[...]
    pre_p = shared + _dot_f32(ldp_ref[...].astype(bf16), w1ld_ref[...])
    pre_n = shared + _dot_f32(ldn_ref[...].astype(bf16), w1ld_ref[...])
    head_args = (w2_ref[...], b2_ref[...], w3_ref[...], b3_ref[0, 0])
    s1 = _head(pre_p, *head_args)
    s2 = _head(pre_n, *head_args)
    o_ref[...] = jax.nn.sigmoid(s1 - s2).astype(o_ref.dtype)


# ----------------------------------------------------------------------------
# Wrappers
# ----------------------------------------------------------------------------
def _const_spec(shape):
    # Constant block index -> weight stays VMEM resident, no re-DMA per step.
    return pl.BlockSpec(shape, lambda i: (0,) * len(shape))


def _weight_specs():
    return [
        _const_spec((HALF_DIM, H1)),                # w1_mc
        _const_spec((HALF_DIM, H1)),                # w1_ld
        _const_spec((1, H1)),                       # b1
        _const_spec((H1, H2)),                      # w2
        _const_spec((1, H2)),                       # b2
        _const_spec((1, H2)),                       # w3_row
        pl.BlockSpec(memory_space=pltpu.SMEM),      # b3 (1,1) scalar
    ]


def _compiler_params():
    return pltpu.CompilerParams(
        dimension_semantics=("parallel",),          # v7x: shard over 2 TCs
        vmem_limit_bytes=_vmem_limit_bytes())


def _launch(kernel, act_inputs, params, *, flops_per_row, trans_per_row):
    b = act_inputs[0].shape[0]
    tile_b = _choose_tile_b(b)
    grid = (pl.cdiv(b, tile_b),)                    # ragged last block is OK:
    # partial input rows read stale VMEM, their scores are garbage, but the
    # masked output store never writes them -> nothing bad reaches HBM.
    act_spec = pl.BlockSpec((tile_b, HALF_DIM), lambda i: (i, 0))
    in_bytes = sum(x.size * x.dtype.itemsize for x in act_inputs)
    cost = pl.CostEstimate(
        flops=flops_per_row * b,
        transcendentals=trans_per_row * b,
        bytes_accessed=in_bytes + _weight_bytes() + b * OUT * 4)
    return pl.pallas_call(
        kernel,
        out_shape=jax.ShapeDtypeStruct((b, OUT), jnp.float32),
        grid=grid,
        in_specs=[act_spec] * len(act_inputs) + _weight_specs(),
        out_specs=pl.BlockSpec((tile_b, OUT), lambda i: (i, 0)),
        compiler_params=_compiler_params(),
        cost_estimate=cost,
    )(*act_inputs, *params)


@jax.jit
def ranknet_forward(mc, ld, params):
    """RankNetWithEmbeddings.forward on packed pooled embeddings.
    mc = [mention || context] [B,600], ld = [label || description] [B,600],
    bf16 preferred (f32 also works, at 2x the HBM traffic)."""
    return _launch(ranknet_forward_kernel, (mc, ld), params,
                   flops_per_row=2 * (IN_DIM * H1 + H1 * H2),
                   trans_per_row=1)


@jax.jit
def ranknet_score_pair(mc, ld_p, ld_n, params):
    """RankNetWithEmbeddings.score_pair: sigmoid(s_pos - s_neg)."""
    return _launch(
        ranknet_score_pair_kernel, (mc, ld_p, ld_n), params,
        flops_per_row=2 * (HALF_DIM * H1 + 2 * HALF_DIM * H1 + 2 * H1 * H2),
        trans_per_row=3)


def pack_inputs(mention, label, description, context):
    """Pack four pooled [B,300] embeddings into the bf16 (mention||context),
    (label||description) halves the kernels consume.  Production code should
    have the embedding producer emit this layout/dtype directly; doing it here
    per call costs an extra HBM round trip."""
    bf16 = jnp.bfloat16
    mc = jnp.concatenate([mention, context], axis=1).astype(bf16)
    ld = jnp.concatenate([label, description], axis=1).astype(bf16)
    return mc, ld


# ----------------------------------------------------------------------------
# Deterministic parameter init (mimics torch.nn.Linear default init).
# W1 rows follow torch.cat([m, l, d, c], dim=1); they are regrouped into the
# (mention||context) and (label||description) halves, matmul weights in bf16.
# ----------------------------------------------------------------------------
def init_params(key):
    def linear(key, fan_in, fan_out):
        kw, kb = jax.random.split(key)
        bound = 1.0 / (fan_in ** 0.5)
        w = jax.random.uniform(kw, (fan_in, fan_out), jnp.float32,
                               -bound, bound)
        b = jax.random.uniform(kb, (1, fan_out), jnp.float32, -bound, bound)
        return w, b

    k1, k2, k3 = jax.random.split(key, 3)
    w1, b1 = linear(k1, IN_DIM, H1)
    w2, b2 = linear(k2, H1, H2)
    w3, b3 = linear(k3, H2, OUT)
    w1_mc = jnp.concatenate([w1[:EMB_DIM], w1[3 * EMB_DIM:]], axis=0)  # m, c
    w1_ld = w1[EMB_DIM:3 * EMB_DIM]                                    # l, d
    bf16 = jnp.bfloat16
    return (w1_mc.astype(bf16), w1_ld.astype(bf16), b1,
            w2.astype(bf16), b2,
            w3.T,            # (1, 64) f32 row for the VPU epilogue
            b3)              # (1, 1) f32 scalar (SMEM)


# ----------------------------------------------------------------------------
# Pure-JAX reference (same bf16-operand / f32-accumulate numerics).
# ----------------------------------------------------------------------------
def ranknet_forward_ref(mc, ld, params):
    w1mc, w1ld, b1, w2, b2, w3_row, b3 = params
    bf16 = jnp.bfloat16
    pre1 = (_dot_f32(mc.astype(bf16), w1mc)
            + _dot_f32(ld.astype(bf16), w1ld) + b1)
    h1 = jnp.maximum(pre1, 0.0)
    h2 = jnp.maximum(_dot_f32(h1.astype(bf16), w2) + b2, 0.0)
    return jnp.tanh(h2 @ w3_row.T + b3)


if __name__ == "__main__":
    key = jax.random.PRNGKey(0)
    kp, kd = jax.random.split(key)
    params = init_params(kp)

    def make_inputs(b, seed_key):
        ks = jax.random.split(seed_key, 6)
        mention, context, label_p, descr_p, label_n, descr_n = [
            jax.random.normal(k, (b, EMB_DIM), jnp.float32) for k in ks]
        mc, ld_p = pack_inputs(mention, label_p, descr_p, context)
        _, ld_n = pack_inputs(mention, label_n, descr_n, context)
        return mc, ld_p, ld_n

    # --- small batch (single tile) -------------------------------------
    B = 8
    mc, ld_p, ld_n = make_inputs(B, kd)

    s = jax.block_until_ready(ranknet_forward(mc, ld_p, params))
    s_ref = ranknet_forward_ref(mc, ld_p, params)
    assert s.shape == (B, OUT)
    assert jnp.allclose(s, s_ref, atol=2e-4, rtol=2e-4)

    out = jax.block_until_ready(ranknet_score_pair(mc, ld_p, ld_n, params))
    out_ref = jax.nn.sigmoid(s_ref - ranknet_forward_ref(mc, ld_n, params))
    assert out.shape == (B, OUT)
    assert jnp.allclose(out, out_ref, atol=2e-4, rtol=2e-4)

    # --- larger, non-multiple batch (ragged last block + >=2 grid steps) ---
    B2 = 1037
    mc2, ldp2, ldn2 = make_inputs(B2, jax.random.PRNGKey(7))

    s_big = jax.block_until_ready(ranknet_forward(mc2, ldp2, params))
    s_big_ref = ranknet_forward_ref(mc2, ldp2, params)
    assert s_big.shape == (B2, OUT)
    assert jnp.allclose(s_big, s_big_ref, atol=2e-4, rtol=2e-4)

    out_big = jax.block_until_ready(ranknet_score_pair(mc2, ldp2, ldn2, params))
    out_big_ref = jax.nn.sigmoid(
        s_big_ref - ranknet_forward_ref(mc2, ldn2, params))
    assert out_big.shape == (B2, OUT)
    assert jnp.allclose(out_big, out_big_ref, atol=2e-4, rtol=2e-4)

    print("KERNEL_OK")
</pallas_src>

<mosaic_0001>
module attributes {stable_mosaic.version = 11 : i64} {
  func.func @ranknet_forward_kernel(%arg0: i32, %arg1: memref<8x600xbf16, #tpu.memory_space<vmem>>, %arg2: memref<8x600xbf16, #tpu.memory_space<vmem>>, %arg3: memref<600x256xbf16, #tpu.memory_space<vmem>>, %arg4: memref<600x256xbf16, #tpu.memory_space<vmem>>, %arg5: memref<1x256xf32, #tpu.memory_space<vmem>>, %arg6: memref<256x64xbf16, #tpu.memory_space<vmem>>, %arg7: memref<1x64xf32, #tpu.memory_space<vmem>>, %arg8: memref<1x64xf32, #tpu.memory_space<vmem>>, %arg9: memref<1x1xf32, #tpu.memory_space<smem>>, %arg10: memref<8x1xf32, #tpu.memory_space<vmem>>) attributes {dimension_semantics = [#tpu.dimension_semantics<parallel>], iteration_bounds = array<i64: 1>, scalar_prefetch = 0 : i64, scratch_operands = 0 : i64, tpu.core_type = #tpu.core_type<tc>, window_params = [{transform_indices = @transform_0, window_bounds = array<i64: 8, 600>}, {transform_indices = @transform_1, window_bounds = array<i64: 8, 600>}, {pipeline_mode = #tpu.pipeline_mode<synchronous>, transform_indices = @transform_2, window_bounds = array<i64: 600, 256>}, {pipeline_mode = #tpu.pipeline_mode<synchronous>, transform_indices = @transform_3, window_bounds = array<i64: 600, 256>}, {pipeline_mode = #tpu.pipeline_mode<synchronous>, transform_indices = @transform_4, window_bounds = array<i64: 1, 256>}, {pipeline_mode = #tpu.pipeline_mode<synchronous>, transform_indices = @transform_5, window_bounds = array<i64: 256, 64>}, {pipeline_mode = #tpu.pipeline_mode<synchronous>, transform_indices = @transform_6, window_bounds = array<i64: 1, 64>}, {pipeline_mode = #tpu.pipeline_mode<synchronous>, transform_indices = @transform_7, window_bounds = array<i64: 1, 64>}, {transform_indices = @transform_8, window_bounds = array<i64: 1, 1>}, {transform_indices = @transform_9, window_bounds = array<i64: 8, 1>}]} {
    %c0 = arith.constant 0 : index
    %c0_0 = arith.constant 0 : index
    %0 = vector.load %arg1[%c0, %c0_0] : memref<8x600xbf16, #tpu.memory_space<vmem>>, vector<8x600xbf16>
    %c0_1 = arith.constant 0 : index
    %c0_2 = arith.constant 0 : index
    %1 = vector.load %arg3[%c0_1, %c0_2] : memref<600x256xbf16, #tpu.memory_space<vmem>>, vector<600x256xbf16>
    %cst = arith.constant dense<0.000000e+00> : vector<8x256xf32>
    %2 = tpu.matmul %0, %1, %cst {dimension_numbers = #tpu.dot_dimension_numbers<[1], [0], [0], [1], [0, 0, 1, 1], [], []>} : vector<8x600xbf16>, vector<600x256xbf16>, vector<8x256xf32> -> vector<8x256xf32>
    %c0_3 = arith.constant 0 : index
    %c0_4 = arith.constant 0 : index
    %3 = vector.load %arg2[%c0_3, %c0_4] : memref<8x600xbf16, #tpu.memory_space<vmem>>, vector<8x600xbf16>
    %c0_5 = arith.constant 0 : index
    %c0_6 = arith.constant 0 : index
    %4 = vector.load %arg4[%c0_5, %c0_6] : memref<600x256xbf16, #tpu.memory_space<vmem>>, vector<600x256xbf16>
    %cst_7 = arith.constant dense<0.000000e+00> : vector<8x256xf32>
    %5 = tpu.matmul %3, %4, %cst_7 {dimension_numbers = #tpu.dot_dimension_numbers<[1], [0], [0], [1], [0, 0, 1, 1], [], []>} : vector<8x600xbf16>, vector<600x256xbf16>, vector<8x256xf32> -> vector<8x256xf32>
    %6 = arith.addf %2, %5 : vector<8x256xf32>
    %c0_8 = arith.constant 0 : index
    %c0_9 = arith.constant 0 : index
    %7 = vector.load %arg5[%c0_8, %c0_9] : memref<1x256xf32, #tpu.memory_space<vmem>>, vector<1x256xf32>
    %8 = vector.broadcast %7 : vector<1x256xf32> to vector<8x256xf32>
    %9 = arith.addf %6, %8 : vector<8x256xf32>
    %c0_10 = arith.constant 0 : index
    %c0_11 = arith.constant 0 : index
    %10 = vector.load %arg6[%c0_10, %c0_11] : memref<256x64xbf16, #tpu.memory_space<vmem>>, vector<256x64xbf16>
    %c0_12 = arith.constant 0 : index
    %c0_13 = arith.constant 0 : index
    %11 = vector.load %arg7[%c0_12, %c0_13] : memref<1x64xf32, #tpu.memory_space<vmem>>, vector<1x64xf32>
    %c0_14 = arith.constant 0 : index
    %c0_15 = arith.constant 0 : index
    %12 = vector.load %arg8[%c0_14, %c0_15] : memref<1x64xf32, #tpu.memory_space<vmem>>, vector<1x64xf32>
    %c0_16 = arith.constant 0 : index
    %c0_17 = arith.constant 0 : index
    %13 = memref.load %arg9[%c0_16, %c0_17] : memref<1x1xf32, #tpu.memory_space<smem>>
    %cst_18 = arith.constant 0.000000e+00 : f32
    %14 = vector.broadcast %cst_18 : f32 to vector<8x256xf32>
    %15 = arith.maximumf %9, %14 : vector<8x256xf32>
    %16 = arith.truncf %15 : vector<8x256xf32> to vector<8x256xbf16>
    %cst_19 = arith.constant dense<0.000000e+00> : vector<8x64xf32>
    %17 = tpu.matmul %16, %10, %cst_19 {dimension_numbers = #tpu.dot_dimension_numbers<[1], [0], [0], [1], [0, 0, 1, 1], [], []>} : vector<8x256xbf16>, vector<256x64xbf16>, vector<8x64xf32> -> vector<8x64xf32>
    %18 = vector.broadcast %11 : vector<1x64xf32> to vector<8x64xf32>
    %19 = arith.addf %17, %18 : vector<8x64xf32>
    %cst_20 = arith.constant 0.000000e+00 : f32
    %20 = vector.broadcast %cst_20 : f32 to vector<8x64xf32>
    %21 = arith.maximumf %19, %20 : vector<8x64xf32>
    %22 = vector.broadcast %12 : vector<1x64xf32> to vector<8x64xf32>
    %23 = arith.mulf %21, %22 : vector<8x64xf32>
    %cst_21 = arith.constant dense<0.000000e+00> : vector<8xf32>
    %24 = vector.multi_reduction <add>, %23, %cst_21 [1] : vector<8x64xf32> to vector<8xf32>
    %25 = vector.shape_cast %24 : vector<8xf32> to vector<8x1xf32>
    %26 = vector.broadcast %13 : f32 to vector<8x1xf32>
    %27 = arith.addf %25, %26 : vector<8x1xf32>
    %28 = math.tanh %27 : vector<8x1xf32>
    %c0_22 = arith.constant 0 : index
    %c0_23 = arith.constant 0 : index
    %29 = vector.load %arg10[%c0_22, %c0_23] : memref<8x1xf32, #tpu.memory_space<vmem>>, vector<8x1xf32>
    tpu.vector_store %arg10[%c0_22, %c0_23], %28 {strides = array<i32>} : memref<8x1xf32, #tpu.memory_space<vmem>>, vector<8x1xf32>,
    return
  }
  func.func @transform_0(%arg0: i32) -> (i32, i32) {
    %c0_i32 = arith.constant 0 : i32
    %c0_i32_0 = arith.constant 0 : i32
    return %arg0, %c0_i32 : i32, i32
  }
  func.func @transform_1(%arg0: i32) -> (i32, i32) {
    %c0_i32 = arith.constant 0 : i32
    %c0_i32_0 = arith.constant 0 : i32
    return %arg0, %c0_i32 : i32, i32
  }
  func.func @transform_2(%arg0: i32) -> (i32, i32) {
    %c0_i32 = arith.constant 0 : i32
    %c0_i32_0 = arith.constant 0 : i32
    %c0_i32_1 = arith.constant 0 : i32
    return %c0_i32, %c0_i32_0 : i32, i32
  }
  func.func @transform_3(%arg0: i32) -> (i32, i32) {
    %c0_i32 = arith.constant 0 : i32
    %c0_i32_0 = arith.constant 0 : i32
    %c0_i32_1 = arith.constant 0 : i32
    return %c0_i32, %c0_i32_0 : i32, i32
  }
  func.func @transform_4(%arg0: i32) -> (i32, i32) {
    %c0_i32 = arith.constant 0 : i32
    %c0_i32_0 = arith.constant 0 : i32
    %c0_i32_1 = arith.constant 0 : i32
    return %c0_i32, %c0_i32_0 : i32, i32
  }
  func.func @transform_5(%arg0: i32) -> (i32, i32) {
    %c0_i32 = arith.constant 0 : i32
    %c0_i32_0 = arith.constant 0 : i32
    %c0_i32_1 = arith.constant 0 : i32
    return %c0_i32, %c0_i32_0 : i32, i32
  }
  func.func @transform_6(%arg0: i32) -> (i32, i32) {
    %c0_i32 = arith.constant 0 : i32
    %c0_i32_0 = arith.constant 0 : i32
    %c0_i32_1 = arith.constant 0 : i32
    return %c0_i32, %c0_i32_0 : i32, i32
  }
  func.func @transform_7(%arg0: i32) -> (i32, i32) {
    %c0_i32 = arith.constant 0 : i32
    %c0_i32_0 = arith.constant 0 : i32
    %c0_i32_1 = arith.constant 0 : i32
    return %c0_i32, %c0_i32_0 : i32, i32
  }
  func.func @transform_8(%arg0: i32) -> (i32, i32) {
    %c0_i32 = arith.constant 0 : i32
    %c0_i32_0 = arith.constant 0 : i32
    %c0_i32_1 = arith.constant 0 : i32
    return %c0_i32, %c0_i32_0 : i32, i32
  }
  func.func @transform_9(%arg0: i32) -> (i32, i32) {
    %c0_i32 = arith.constant 0 : i32
    %c0_i32_0 = arith.constant 0 : i32
    return %arg0, %c0_i32 : i32, i32
  }
}

</mosaic_0001>

<llo_original>
// kernel: ranknet_forward.1
$region0: #{ranknet_forward.1}
  #allocation0 [shape = 'u32[]', space=smem, size = 0x4, offset = 0x4, fixed_abs, tag = 'smem constant byte address 0x4 - core index']
  #allocation1 [shape = 'u32[144,128]{1,0:T(1,128)}', space=vmem, size = 0x12000, scoped, tag = 'internal scratch']
  #allocation2 [shape = 'f32[1,1]{1,0:T(1,128)S(6)}', space=smem, size = 0x200, scoped, tag = 'scoped memory for ranknet_forward.1']
  %s0 = inlined_call_operand.hbm [shape: bf16[8,600], index: 0, kind: input, shape index: {}]
  %s1 = inlined_call_operand.hbm [shape: bf16[8,600], index: 1, kind: input, shape index: {}]
  %s2 = inlined_call_operand.hbm [shape: bf16[600,256], index: 2, kind: input, shape index: {}]
  %s3 = inlined_call_operand.hbm [shape: bf16[600,256], index: 3, kind: input, shape index: {}]
  %s4 = inlined_call_operand.hbm [shape: f32[1,256], index: 4, kind: input, shape index: {}]
  %s5 = inlined_call_operand.hbm [shape: bf16[256,64], index: 5, kind: input, shape index: {}]
  %s6 = inlined_call_operand.hbm [shape: f32[1,64], index: 6, kind: input, shape index: {}]
  %s7 = inlined_call_operand.hbm [shape: f32[1,64], index: 7, kind: input, shape index: {}]
  %s8 = inlined_call_operand.<no memory space> [shape: f32[1,1], index: 8, kind: input, shape index: {}]
  %s9 = inlined_call_operand.hbm [shape: f32[8,1], index: 9, kind: output, shape index: {}]
  %s10 = sld [smem:[#allocation0]]
  $region78: #{ranknet_forward.1} parent=0
    _
  %s12 = ssub.s32 1, %s10
  %s13 = scalar_select 0, %s12, %s10
  %14 = sst [smem:[#allocation2]] %s8
  $region1: #{ranknet_forward.1} parent=0
    #allocation3 [shape = 'u8[10240]{0}', space=vmem, size = 0x2800, scoped, tag = 'input window, operand 0, single buffered']
    #allocation4 [shape = 's32[1]{0}', space=sflag, size = 0x4, scoped, tag = 'scoped memory for ranknet_forward.1']
    #allocation5 [shape = 's32[1]{0}', space=sflag, size = 0x4, scoped, tag = 'scoped memory for ranknet_forward.1']
    #allocation6 [shape = 'u8[10240]{0}', space=vmem, size = 0x2800, scoped, tag = 'input window, operand 1, single buffered']
    #allocation7 [shape = 's32[1]{0}', space=sflag, size = 0x4, scoped, tag = 'scoped memory for ranknet_forward.1']
    #allocation8 [shape = 'u8[307200]{0}', space=vmem, size = 0x4b000, scoped, tag = 'input window, operand 2, single buffered']
    #allocation9 [shape = 'u8[307200]{0}', space=vmem, size = 0x4b000, scoped, tag = 'input window, operand 3, single buffered']
    #allocation10 [shape = 's32[1]{0}', space=sflag, size = 0x4, scoped, tag = 'scoped memory for ranknet_forward.1']
    #allocation11 [shape = 'u8[1024]{0}', space=vmem, size = 0x400, scoped, tag = 'input window, operand 4, single buffered']
    #allocation12 [shape = 'u8[65536]{0}', space=vmem, size = 0x10000, scoped, tag = 'input window, operand 5, single buffered']
    #allocation13 [shape = 's32[1]{0}', space=sflag, size = 0x4, scoped, tag = 'scoped memory for ranknet_forward.1']
    #allocation14 [shape = 'u8[512]{0}', space=vmem, size = 0x400, scoped, tag = 'input window, operand 6, single buffered']
    #allocation15 [shape = 'u8[512]{0}', space=vmem, size = 0x400, scoped, tag = 'input window, operand 7, single buffered']
    #allocation16 [shape = 's32[1]{0}', space=sflag, size = 0x4, scoped, tag = 'scoped memory for ranknet_forward.1']
    #allocation17 [shape = 'u8[4096]{0}', space=vmem, size = 0x1000, scoped, tag = 'output window, operand 0, single buffered']
    %15 = vsyncpa [#allocation4], 0
    %16 = vsyncpa [#allocation7], 0
    %17 = vsyncpa [#allocation10], 0
    %18 = vsyncpa [#allocation13], 0
    %19 = vsyncpa [#allocation16], 0
    %20 = vsyncpa [#allocation5], 0
    // Predicated region
    $region2: #{ranknet_forward.1} parent=1 // pred_check
      _
    $region3: #{ranknet_forward.1} parent=1 // pred_check_branch
      %22 = sbr.rel (0) target = $region5
    $region4: #{ranknet_forward.1} parent=1 // pred_region
      %s24 = ssub.s32 320, 320
      %25 = vsyncadd [#allocation4], %s24
      %s27 = sshll.u32 [#allocation3], 4
      %s28 = int_to_ptr.vmem [resolvable:$true] %s27
      %30 = dma.hbm_to_vmem [thread:$0]  %s0, 320, %s28, [#allocation4]
    $region5: #{ranknet_forward.1} parent=1 // pred_fallthru
      _
    // Predicated region
    $region6: #{ranknet_forward.1} parent=1 // pred_check
      _
    $region7: #{ranknet_forward.1} parent=1 // pred_check_branch
      %32 = sbr.rel (0) target = $region9
    $region8: #{ranknet_forward.1} parent=1 // pred_region
      %s34 = ssub.s32 320, 320
      %35 = vsyncadd [#allocation7], %s34
      %s37 = sshll.u32 [#allocation6], 4
      %s38 = int_to_ptr.vmem [resolvable:$true] %s37
      %40 = dma.hbm_to_vmem [thread:$0]  %s1, 320, %s38, [#allocation7]
    $region9: #{ranknet_forward.1} parent=1 // pred_fallthru
      _
    // Predicated region
    $region10: #{ranknet_forward.1} parent=1 // pred_check
      _
    $region11: #{ranknet_forward.1} parent=1 // pred_check_branch
      %42 = sbr.rel (0) target = $region13
    $region12: #{ranknet_forward.1} parent=1 // pred_region
      %s44 = ssub.s32 9600, 9600
      %45 = vsyncadd [#allocation7], %s44
      %s46 = sshll.u32 [#allocation8], 4
      %s47 = int_to_ptr.vmem [resolvable:$true] %s46
      %52 = dma.hbm_to_vmem [thread:$0]  %s2, 9600, %s47, [#allocation7], 128, 128, 8
    $region13: #{ranknet_forward.1} parent=1 // pred_fallthru
      _
    // Predicated region
    $region14: #{ranknet_forward.1} parent=1 // pred_check
      _
    $region15: #{ranknet_forward.1} parent=1 // pred_check_branch
      %54 = sbr.rel (0) target = $region17
    $region16: #{ranknet_forward.1} parent=1 // pred_region
      %s56 = ssub.s32 9600, 9600
      %57 = vsyncadd [#allocation10], %s56
      %s58 = sshll.u32 [#allocation9], 4
      %s59 = int_to_ptr.vmem [resolvable:$true] %s58
      %64 = dma.hbm_to_vmem [thread:$0]  %s3, 9600, %s59, [#allocation10], 128, 128, 8
    $region17: #{ranknet_forward.1} parent=1 // pred_fallthru
      _
    // Predicated region
    $region18: #{ranknet_forward.1} parent=1 // pred_check
      _
    $region19: #{ranknet_forward.1} parent=1 // pred_check_branch
      %66 = sbr.rel (0) target = $region21
    $region20: #{ranknet_forward.1} parent=1 // pred_region
      %s68 = ssub.s32 32, 32
      %69 = vsyncadd [#allocation10], %s68
      %s71 = sshll.u32 [#allocation11], 4
      %s72 = int_to_ptr.vmem [resolvable:$true] %s71
      %74 = dma.hbm_to_vmem [thread:$0]  %s4, 32, %s72, [#allocation10]
    $region21: #{ranknet_forward.1} parent=1 // pred_fallthru
      _
    // Predicated region
    $region22: #{ranknet_forward.1} parent=1 // pred_check
      _
    $region23: #{ranknet_forward.1} parent=1 // pred_check_branch
      %76 = sbr.rel (0) target = $region25
    $region24: #{ranknet_forward.1} parent=1 // pred_region
      %s78 = ssub.s32 2048, 2048
      %79 = vsyncadd [#allocation13], %s78
      %s80 = sshll.u32 [#allocation12], 4
      %s81 = int_to_ptr.vmem [resolvable:$true] %s80
      %86 = dma.hbm_to_vmem [thread:$0]  %s5, 2048, %s81, [#allocation13], 64, 64, 4
    $region25: #{ranknet_forward.1} parent=1 // pred_fallthru
      _
    // Predicated region
    $region26: #{ranknet_forward.1} parent=1 // pred_check
      _
    $region27: #{ranknet_forward.1} parent=1 // pred_check_branch
      %88 = sbr.rel (0) target = $region29
    $region28: #{ranknet_forward.1} parent=1 // pred_region
      %s90 = ssub.s32 16, 16
      %91 = vsyncadd [#allocation13], %s90
      %s93 = sshll.u32 [#allocation14], 4
      %s94 = int_to_ptr.vmem [resolvable:$true] %s93
      %96 = dma.hbm_to_vmem [thread:$0]  %s6, 16, %s94, [#allocation13]
    $region29: #{ranknet_forward.1} parent=1 // pred_fallthru
      _
    // Predicated region
    $region30: #{ranknet_forward.1} parent=1 // pred_check
      _
    $region31: #{ranknet_forward.1} parent=1 // pred_check_branch
      %98 = sbr.rel (0) target = $region33
    $region32: #{ranknet_forward.1} parent=1 // pred_region
      %s100 = ssub.s32 16, 16
      %101 = vsyncadd [#allocation16], %s100
      %s103 = sshll.u32 [#allocation15], 4
      %s104 = int_to_ptr.vmem [resolvable:$true] %s103
      %106 = dma.hbm_to_vmem [thread:$0]  %s7, 16, %s104, [#allocation16]
    $region33: #{ranknet_forward.1} parent=1 // pred_fallthru
      _
    // Predicated region
    $region34: #{ranknet_forward.1} parent=1 // pred_check
      _
    $region35: #{ranknet_forward.1} parent=1 // pred_check_branch
      %108 = sbr.rel (0) target = $region37
    $region36: #{ranknet_forward.1} parent=1 // pred_region
      _
    $region37: #{ranknet_forward.1} parent=1 // pred_fallthru
      _
    // Predicated region
    $region38: #{ranknet_forward.1} parent=1 // pred_check
      _
    $region39: #{ranknet_forward.1} parent=1 // pred_check_branch
      %110 = sbr.rel (0) target = $region41
    $region40: #{ranknet_forward.1} parent=1 // pred_region
      %111 = dma.done [#allocation4], 320
    $region41: #{ranknet_forward.1} parent=1 // pred_fallthru
      _
    // Predicated region
    $region42: #{ranknet_forward.1} parent=1 // pred_check
      _
    $region43: #{ranknet_forward.1} parent=1 // pred_check_branch
      %113 = sbr.rel (0) target = $region45
    $region44: #{ranknet_forward.1} parent=1 // pred_region
      %114 = dma.done [#allocation7], 320
    $region45: #{ranknet_forward.1} parent=1 // pred_fallthru
      _
    // Predicated region
    $region46: #{ranknet_forward.1} parent=1 // pred_check
      _
    $region47: #{ranknet_forward.1} parent=1 // pred_check_branch
      %116 = sbr.rel (0) target = $region49
    $region48: #{ranknet_forward.1} parent=1 // pred_region
      %117 = dma.done [#allocation7], 9600
    $region49: #{ranknet_forward.1} parent=1 // pred_fallthru
      _
    // Predicated region
    $region50: #{ranknet_forward.1} parent=1 // pred_check
      _
    $region51: #{ranknet_forward.1} parent=1 // pred_check_branch
      %119 = sbr.rel (0) target = $region53
    $region52: #{ranknet_forward.1} parent=1 // pred_region
      %120 = dma.done [#allocation10], 9600
    $region53: #{ranknet_forward.1} parent=1 // pred_fallthru
      _
    // Predicated region
    $region54: #{ranknet_forward.1} parent=1 // pred_check
      _
    $region55: #{ranknet_forward.1} parent=1 // pred_check_branch
      %122 = sbr.rel (0) target = $region57
    $region56: #{ranknet_forward.1} parent=1 // pred_region
      %123 = dma.done [#allocation10], 32
    $region57: #{ranknet_forward.1} parent=1 // pred_fallthru
      _
    // Predicated region
    $region58: #{ranknet_forward.1} parent=1 // pred_check
      _
    $region59: #{ranknet_forward.1} parent=1 // pred_check_branch
      %125 = sbr.rel (0) target = $region61
    $region60: #{ranknet_forward.1} parent=1 // pred_region
      %126 = dma.done [#allocation13], 2048
    $region61: #{ranknet_forward.1} parent=1 // pred_fallthru
      _
    // Predicated region
    $region62: #{ranknet_forward.1} parent=1 // pred_check
      _
    $region63: #{ranknet_forward.1} parent=1 // pred_check_branch
      %128 = sbr.rel (0) target = $region65
    $region64: #{ranknet_forward.1} parent=1 // pred_region
      %129 = dma.done [#allocation13], 16
    $region65: #{ranknet_forward.1} parent=1 // pred_fallthru
      _
    // Predicated region
    $region66: #{ranknet_forward.1} parent=1 // pred_check
      _
    $region67: #{ranknet_forward.1} parent=1 // pred_check_branch
      %131 = sbr.rel (0) target = $region69
    $region68: #{ranknet_forward.1} parent=1 // pred_region
      %132 = dma.done [#allocation16], 16
    $region69: #{ranknet_forward.1} parent=1 // pred_fallthru
      _
    %v134 = vld [vmem:[#allocation3] sm:$0xff]
    %v135 = vld [vmem:[#allocation3 + $0x8] sm:$0xff]
    %v136 = vld [vmem:[#allocation3 + $0x10] sm:$0xf]
    %v137 = vld [vmem:[#allocation8] sm:$0xff]
    %v138 = vld [vmem:[#allocation8 + $0x8] sm:$0xff]
    %v139 = vld [vmem:[#allocation8 + $0x10] sm:$0xff]
    %v140 = vld [vmem:[#allocation8 + $0x18] sm:$0xff]
    %v141 = vld [vmem:[#allocation8 + $0x20] sm:$0xff]
    %v142 = vld [vmem:[#allocation8 + $0x28] sm:$0xff]
    %v143 = vld [vmem:[#allocation8 + $0x30] sm:$0xff]
    %v144 = vld [vmem:[#allocation8 + $0x38] sm:$0xff]
    %v145 = vld [vmem:[#allocation8 + $0x40] sm:$0xff]
    %v146 = vld [vmem:[#allocation8 + $0x48] sm:$0xff]
    %v147 = vld [vmem:[#allocation8 + $0x50] sm:$0xff]
    %v148 = vld [vmem:[#allocation8 + $0x58] sm:$0xff]
    %v149 = vld [vmem:[#allocation8 + $0x60] sm:$0xff]
    %v150 = vld [vmem:[#allocation8 + $0x68] sm:$0xff]
    %v151 = vld [vmem:[#allocation8 + $0x70] sm:$0xff]
    %v152 = vld [vmem:[#allocation8 + $0x78] sm:$0xff]
    %v153 = vld [vmem:[#allocation8 + $0x80] sm:$0xff]
    %v154 = vld [vmem:[#allocation8 + $0x88] sm:$0xff]
    %v155 = vld [vmem:[#allocation8 + $0x90] sm:$0xff]
    %v156 = vld [vmem:[#allocation8 + $0x98] sm:$0xff]
    %v157 = vld [vmem:[#allocation8 + $0xa0] sm:$0xff]
    %v158 = vld [vmem:[#allocation8 + $0xa8] sm:$0xff]
    %v159 = vld [vmem:[#allocation8 + $0xb0] sm:$0xff]
    %v160 = vld [vmem:[#allocation8 + $0xb8] sm:$0xff]
    %v161 = vld [vmem:[#allocation8 + $0xc0] sm:$0xff]
    %v162 = vld [vmem:[#allocation8 + $0xc8] sm:$0xff]
    %v163 = vld [vmem:[#allocation8 + $0xd0] sm:$0xff]
    %v164 = vld [vmem:[#allocation8 + $0xd8] sm:$0xff]
    %v165 = vld [vmem:[#allocation8 + $0xe0] sm:$0xff]
    %v166 = vld [vmem:[#allocation8 + $0xe8] sm:$0xff]
    %v167 = vld [vmem:[#allocation8 + $0xf0] sm:$0xff]
    %v168 = vld [vmem:[#allocation8 + $0xf8] sm:$0xff]
    %v169 = vld [vmem:[#allocation8 + $0x100] sm:$0xff]
    %v170 = vld [vmem:[#allocation8 + $0x108] sm:$0xff]
    %v171 = vld [vmem:[#allocation8 + $0x110] sm:$0xff]
    %v172 = vld [vmem:[#allocation8 + $0x118] sm:$0xff]
    %v173 = vld [vmem:[#allocation8 + $0x120] sm:$0xff]
    %v174 = vld [vmem:[#allocation8 + $0x128] sm:$0xff]
    %v175 = vld [vmem:[#allocation8 + $0x130] sm:$0xff]
    %v176 = vld [vmem:[#allocation8 + $0x138] sm:$0xff]
    %v177 = vld [vmem:[#allocation8 + $0x140] sm:$0xff]
    %v178 = vld [vmem:[#allocation8 + $0x148] sm:$0xff]
    %v179 = vld [vmem:[#allocation8 + $0x150] sm:$0xff]
    %v180 = vld [vmem:[#allocation8 + $0x158] sm:$0xff]
    %v181 = vld [vmem:[#allocation8 + $0x160] sm:$0xff]
    %v182 = vld [vmem:[#allocation8 + $0x168] sm:$0xff]
    %v183 = vld [vmem:[#allocation8 + $0x170] sm:$0xff]
    %v184 = vld [vmem:[#allocation8 + $0x178] sm:$0xff]
    %v185 = vld [vmem:[#allocation8 + $0x180] sm:$0xff]
    %v186 = vld [vmem:[#allocation8 + $0x188] sm:$0xff]
    %v187 = vld [vmem:[#allocation8 + $0x190] sm:$0xff]
    %v188 = vld [vmem:[#allocation8 + $0x198] sm:$0xff]
    %v189 = vld [vmem:[#allocation8 + $0x1a0] sm:$0xff]
    %v190 = vld [vmem:[#allocation8 + $0x1a8] sm:$0xff]
    %v191 = vld [vmem:[#allocation8 + $0x1b0] sm:$0xff]
    %v192 = vld [vmem:[#allocation8 + $0x1b8] sm:$0xff]
    %v193 = vld [vmem:[#allocation8 + $0x1c0] sm:$0xff]
    %v194 = vld [vmem:[#allocation8 + $0x1c8] sm:$0xff]
    %v195 = vld [vmem:[#allocation8 + $0x1d0] sm:$0xff]
    %v196 = vld [vmem:[#allocation8 + $0x1d8] sm:$0xff]
    %v197 = vld [vmem:[#allocation8 + $0x1e0] sm:$0xff]
    %v198 = vld [vmem:[#allocation8 + $0x1e8] sm:$0xff]
    %v199 = vld [vmem:[#allocation8 + $0x1f0] sm:$0xff]
    %v200 = vld [vmem:[#allocation8 + $0x1f8] sm:$0xff]
    %v201 = vld [vmem:[#allocation8 + $0x200] sm:$0xff]
    %v202 = vld [vmem:[#allocation8 + $0x208] sm:$0xff]
    %v203 = vld [vmem:[#allocation8 + $0x210] sm:$0xff]
    %v204 = vld [vmem:[#allocation8 + $0x218] sm:$0xff]
    %v205 = vld [vmem:[#allocation8 + $0x220] sm:$0xff]
    %v206 = vld [vmem:[#allocation8 + $0x228] sm:$0xff]
    %v207 = vld [vmem:[#allocation8 + $0x230] sm:$0xff]
    %v208 = vld [vmem:[#allocation8 + $0x238] sm:$0xff]
    %v209 = vld [vmem:[#allocation8 + $0x240] sm:$0xff]
    %v210 = vld [vmem:[#allocation8 + $0x248] sm:$0xff]
    %v211 = vld [vmem:[#allocation8 + $0x250] sm:$0xff]
    %v212 = vld [vmem:[#allocation6] sm:$0xff]
    %v213 = vld [vmem:[#allocation6 + $0x8] sm:$0xff]
    %v214 = vld [vmem:[#allocation6 + $0x10] sm:$0xf]
    %v215 = vld [vmem:[#allocation9] sm:$0xff]
    %v216 = vld [vmem:[#allocation9 + $0x8] sm:$0xff]
    %v217 = vld [vmem:[#allocation9 + $0x10] sm:$0xff]
    %v218 = vld [vmem:[#allocation9 + $0x18] sm:$0xff]
    %v219 = vld [vmem:[#allocation9 + $0x20] sm:$0xff]
    %v220 = vld [vmem:[#allocation9 + $0x28] sm:$0xff]
    %v221 = vld [vmem:[#allocation9 + $0x30] sm:$0xff]
    %v222 = vld [vmem:[#allocation9 + $0x38] sm:$0xff]
    %v223 = vld [vmem:[#allocation9 + $0x40] sm:$0xff]
    %v224 = vld [vmem:[#allocation9 + $0x48] sm:$0xff]
    %v225 = vld [vmem:[#allocation9 + $0x50] sm:$0xff]
    %v226 = vld [vmem:[#allocation9 + $0x58] sm:$0xff]
    %v227 = vld [vmem:[#allocation9 + $0x60] sm:$0xff]
    %v228 = vld [vmem:[#allocation9 + $0x68] sm:$0xff]
    %v229 = vld [vmem:[#allocation9 + $0x70] sm:$0xff]
    %v230 = vld [vmem:[#allocation9 + $0x78] sm:$0xff]
    %v231 = vld [vmem:[#allocation9 + $0x80] sm:$0xff]
    %v232 = vld [vmem:[#allocation9 + $0x88] sm:$0xff]
    %v233 = vld [vmem:[#allocation9 + $0x90] sm:$0xff]
    %v234 = vld [vmem:[#allocation9 + $0x98] sm:$0xff]
    %v235 = vld [vmem:[#allocation9 + $0xa0] sm:$0xff]
    %v236 = vld [vmem:[#allocation9 + $0xa8] sm:$0xff]
    %v237 = vld [vmem:[#allocation9 + $0xb0] sm:$0xff]
    %v238 = vld [vmem:[#allocation9 + $0xb8] sm:$0xff]
    %v239 = vld [vmem:[#allocation9 + $0xc0] sm:$0xff]
    %v240 = vld [vmem:[#allocation9 + $0xc8] sm:$0xff]
    %v241 = vld [vmem:[#allocation9 + $0xd0] sm:$0xff]
    %v242 = vld [vmem:[#allocation9 + $0xd8] sm:$0xff]
    %v243 = vld [vmem:[#allocation9 + $0xe0] sm:$0xff]
    %v244 = vld [vmem:[#allocation9 + $0xe8] sm:$0xff]
    %v245 = vld [vmem:[#allocation9 + $0xf0] sm:$0xff]
    %v246 = vld [vmem:[#allocation9 + $0xf8] sm:$0xff]
    %v247 = vld [vmem:[#allocation9 + $0x100] sm:$0xff]
    %v248 = vld [vmem:[#allocation9 + $0x108] sm:$0xff]
    %v249 = vld [vmem:[#allocation9 + $0x110] sm:$0xff]
    %v250 = vld [vmem:[#allocation9 + $0x118] sm:$0xff]
    %v251 = vld [vmem:[#allocation9 + $0x120] sm:$0xff]
    %v252 = vld [vmem:[#allocation9 + $0x128] sm:$0xff]
    %v253 = vld [vmem:[#allocation9 + $0x130] sm:$0xff]
    %v254 = vld [vmem:[#allocation9 + $0x138] sm:$0xff]
    %v255 = vld [vmem:[#allocation9 + $0x140] sm:$0xff]
    %v256 = vld [vmem:[#allocation9 + $0x148] sm:$0xff]
    %v257 = vld [vmem:[#allocation9 + $0x150] sm:$0xff]
    %v258 = vld [vmem:[#allocation9 + $0x158] sm:$0xff]
    %v259 = vld [vmem:[#allocation9 + $0x160] sm:$0xff]
    %v260 = vld [vmem:[#allocation9 + $0x168] sm:$0xff]
    %v261 = vld [vmem:[#allocation9 + $0x170] sm:$0xff]
    %v262 = vld [vmem:[#allocation9 + $0x178] sm:$0xff]
    %v263 = vld [vmem:[#allocation9 + $0x180] sm:$0xff]
    %v264 = vld [vmem:[#allocation9 + $0x188] sm:$0xff]
    %v265 = vld [vmem:[#allocation9 + $0x190] sm:$0xff]
    %v266 = vld [vmem:[#allocation9 + $0x198] sm:$0xff]
    %v267 = vld [vmem:[#allocation9 + $0x1a0] sm:$0xff]
    %v268 = vld [vmem:[#allocation9 + $0x1a8] sm:$0xff]
    %v269 = vld [vmem:[#allocation9 + $0x1b0] sm:$0xff]
    %v270 = vld [vmem:[#allocation9 + $0x1b8] sm:$0xff]
    %v271 = vld [vmem:[#allocation9 + $0x1c0] sm:$0xff]
    %v272 = vld [vmem:[#allocation9 + $0x1c8] sm:$0xff]
    %v273 = vld [vmem:[#allocation9 + $0x1d0] sm:$0xff]
    %v274 = vld [vmem:[#allocation9 + $0x1d8] sm:$0xff]
    %v275 = vld [vmem:[#allocation9 + $0x1e0] sm:$0xff]
    %v276 = vld [vmem:[#allocation9 + $0x1e8] sm:$0xff]
    %v277 = vld [vmem:[#allocation9 + $0x1f0] sm:$0xff]
    %v278 = vld [vmem:[#allocation9 + $0x1f8] sm:$0xff]
    %v279 = vld [vmem:[#allocation9 + $0x200] sm:$0xff]
    %v280 = vld [vmem:[#allocation9 + $0x208] sm:$0xff]
    %v281 = vld [vmem:[#allocation9 + $0x210] sm:$0xff]
    %v282 = vld [vmem:[#allocation9 + $0x218] sm:$0xff]
    %v283 = vld [vmem:[#allocation9 + $0x220] sm:$0xff]
    %v284 = vld [vmem:[#allocation9 + $0x228] sm:$0xff]
    %v285 = vld [vmem:[#allocation9 + $0x230] sm:$0xff]
    %v286 = vld [vmem:[#allocation9 + $0x238] sm:$0xff]
    %v287 = vld [vmem:[#allocation9 + $0x240] sm:$0xff]
    %v288 = vld [vmem:[#allocation9 + $0x248] sm:$0xff]
    %v289 = vld [vmem:[#allocation9 + $0x250] sm:$0xff]
    %v293 = vunpack.c.l.b16 %v212
    %v294 = vunpack.c.h.b16 %v212
    %v295 = vunpack.c.l.b16 %v213
    %v296 = vunpack.c.h.b16 %v213
    %v297 = vunpack.c.l.b16 %v214
    %v298 = vpack.c.b16 %v293, %v293
    %v299 = vpack.c.b16 %v294, %v294
    %v300 = vpack.c.b16 %v295, %v295
    %v301 = vpack.c.b16 %v296, %v296
    %v302 = vpack.c.b16 %v297, %v297
    %v382 = vunpack.c.l.b16 %v215
    %v383 = vunpack.c.h.b16 %v215
    %v384 = vunpack.c.l.b16 %v216
    %v385 = vunpack.c.h.b16 %v216
    %v386 = vunpack.c.l.b16 %v217
    %v387 = vunpack.c.h.b16 %v217
    %v388 = vunpack.c.l.b16 %v218
    %v389 = vunpack.c.h.b16 %v218
    %v390 = vunpack.c.l.b16 %v219
    %v391 = vunpack.c.h.b16 %v219
    %v392 = vunpack.c.l.b16 %v220
    %v393 = vunpack.c.h.b16 %v220
    %v394 = vunpack.c.l.b16 %v221
    %v395 = vunpack.c.h.b16 %v221
    %v396 = vunpack.c.l.b16 %v222
    %v397 = vunpack.c.h.b16 %v222
    %v398 = vunpack.c.l.b16 %v223
    %v399 = vunpack.c.h.b16 %v223
    %v400 = vunpack.c.l.b16 %v224
    %v401 = vunpack.c.h.b16 %v224
    %v402 = vunpack.c.l.b16 %v225
    %v403 = vunpack.c.h.b16 %v225
    %v404 = vunpack.c.l.b16 %v226
    %v405 = vunpack.c.h.b16 %v226
    %v406 = vunpack.c.l.b16 %v227
    %v407 = vunpack.c.h.b16 %v227
    %v408 = vunpack.c.l.b16 %v228
    %v409 = vunpack.c.h.b16 %v228
    %v410 = vunpack.c.l.b16 %v229
    %v411 = vunpack.c.h.b16 %v229
    %v412 = vunpack.c.l.b16 %v230
    %v413 = vunpack.c.h.b16 %v230
    %v414 = vunpack.c.l.b16 %v231
    %v415 = vunpack.c.h.b16 %v231
    %v416 = vunpack.c.l.b16 %v232
    %v417 = vunpack.c.h.b16 %v232
    %v418 = vunpack.c.l.b16 %v233
    %v419 = vunpack.c.h.b16 %v233
    %v420 = vunpack.c.l.b16 %v234
    %v421 = vunpack.c.h.b16 %v234
    %v422 = vunpack.c.l.b16 %v235
    %v423 = vunpack.c.h.b16 %v235
    %v424 = vunpack.c.l.b16 %v236
    %v425 = vunpack.c.h.b16 %v236
    %v426 = vunpack.c.l.b16 %v237
    %v427 = vunpack.c.h.b16 %v237
    %v428 = vunpack.c.l.b16 %v238
    %v429 = vunpack.c.h.b16 %v238
    %v430 = vunpack.c.l.b16 %v239
    %v431 = vunpack.c.h.b16 %v239
    %v432 = vunpack.c.l.b16 %v240
    %v433 = vunpack.c.h.b16 %v240
    %v434 = vunpack.c.l.b16 %v241
    %v435 = vunpack.c.h.b16 %v241
    %v436 = vunpack.c.l.b16 %v242
    %v437 = vunpack.c.h.b16 %v242
    %v438 = vunpack.c.l.b16 %v243
    %v439 = vunpack.c.h.b16 %v243
    %v440 = vunpack.c.l.b16 %v244
    %v441 = vunpack.c.h.b16 %v244
    %v442 = vunpack.c.l.b16 %v245
    %v443 = vunpack.c.h.b16 %v245
    %v444 = vunpack.c.l.b16 %v246
    %v445 = vunpack.c.h.b16 %v246
    %v446 = vunpack.c.l.b16 %v247
    %v447 = vunpack.c.h.b16 %v247
    %v448 = vunpack.c.l.b16 %v248
    %v449 = vunpack.c.h.b16 %v248
    %v450 = vunpack.c.l.b16 %v249
    %v451 = vunpack.c.h.b16 %v249
    %v452 = vunpack.c.l.b16 %v250
    %v453 = vunpack.c.h.b16 %v250
    %v454 = vunpack.c.l.b16 %v251
    %v455 = vunpack.c.h.b16 %v251
    %v456 = vunpack.c.l.b16 %v252
    %v457 = vunpack.c.h.b16 %v252
    %v458 = vunpack.c.l.b16 %v253
    %v459 = vunpack.c.h.b16 %v253
    %v460 = vunpack.c.l.b16 %v254
    %v461 = vunpack.c.h.b16 %v254
    %v462 = vunpack.c.l.b16 %v255
    %v463 = vunpack.c.h.b16 %v255
    %v464 = vunpack.c.l.b16 %v256
    %v465 = vunpack.c.h.b16 %v256
    %v466 = vunpack.c.l.b16 %v257
    %v467 = vunpack.c.h.b16 %v257
    %v468 = vunpack.c.l.b16 %v258
    %v469 = vunpack.c.h.b16 %v258
    %v470 = vunpack.c.l.b16 %v259
    %v471 = vunpack.c.h.b16 %v259
    %v472 = vunpack.c.l.b16 %v260
    %v473 = vunpack.c.h.b16 %v260
    %v474 = vunpack.c.l.b16 %v261
    %v475 = vunpack.c.h.b16 %v261
    %v476 = vunpack.c.l.b16 %v262
    %v477 = vunpack.c.h.b16 %v262
    %v478 = vunpack.c.l.b16 %v263
    %v479 = vunpack.c.h.b16 %v263
    %v480 = vunpack.c.l.b16 %v264
    %v481 = vunpack.c.h.b16 %v264
    %v482 = vunpack.c.l.b16 %v265
    %v483 = vunpack.c.h.b16 %v265
    %v484 = vunpack.c.l.b16 %v266
    %v485 = vunpack.c.h.b16 %v266
    %v486 = vunpack.c.l.b16 %v267
    %v487 = vunpack.c.h.b16 %v267
    %v488 = vunpack.c.l.b16 %v268
    %v489 = vunpack.c.h.b16 %v268
    %v490 = vunpack.c.l.b16 %v269
    %v491 = vunpack.c.h.b16 %v269
    %v492 = vunpack.c.l.b16 %v270
    %v493 = vunpack.c.h.b16 %v270
    %v494 = vunpack.c.l.b16 %v271
    %v495 = vunpack.c.h.b16 %v271
    %v496 = vunpack.c.l.b16 %v272
    %v497 = vunpack.c.h.b16 %v272
    %v498 = vunpack.c.l.b16 %v273
    %v499 = vunpack.c.h.b16 %v273
    %v500 = vunpack.c.l.b16 %v274
    %v501 = vunpack.c.h.b16 %v274
    %v502 = vunpack.c.l.b16 %v275
    %v503 = vunpack.c.h.b16 %v275
    %v504 = vunpack.c.l.b16 %v276
    %v505 = vunpack.c.h.b16 %v276
    %v506 = vunpack.c.l.b16 %v277
    %v507 = vunpack.c.h.b16 %v277
    %v508 = vunpack.c.l.b16 %v278
    %v509 = vunpack.c.h.b16 %v278
    %v510 = vunpack.c.l.b16 %v279
    %v511 = vunpack.c.h.b16 %v279
    %v512 = vunpack.c.l.b16 %v280
    %v513 = vunpack.c.h.b16 %v280
    %v514 = vunpack.c.l.b16 %v281
    %v515 = vunpack.c.h.b16 %v281
    %v516 = vunpack.c.l.b16 %v282
    %v517 = vunpack.c.h.b16 %v282
    %v518 = vunpack.c.l.b16 %v283
    %v519 = vunpack.c.h.b16 %v283
    %v520 = vunpack.c.l.b16 %v284
    %v521 = vunpack.c.h.b16 %v284
    %v522 = vunpack.c.l.b16 %v285
    %v523 = vunpack.c.h.b16 %v285
    %v524 = vunpack.c.l.b16 %v286
    %v525 = vunpack.c.h.b16 %v286
    %v526 = vunpack.c.l.b16 %v287
    %v527 = vunpack.c.h.b16 %v287
    %v528 = vunpack.c.l.b16 %v288
    %v529 = vunpack.c.h.b16 %v288
    %v530 = vunpack.c.l.b16 %v289
    %v531 = vunpack.c.h.b16 %v289
    %v532 = vpack.c.b16 %v384, %v382
    %v533 = vpack.c.b16 %v385, %v383
    %v534 = vpack.c.b16 %v388, %v386
    %v535 = vpack.c.b16 %v389, %v387
    %v536 = vpack.c.b16 %v392, %v390
    %v537 = vpack.c.b16 %v393, %v391
    %v538 = vpack.c.b16 %v396, %v394
    %v539 = vpack.c.b16 %v397, %v395
    %v540 = vpack.c.b16 %v400, %v398
    %v541 = vpack.c.b16 %v401, %v399
    %v542 = vpack.c.b16 %v404, %v402
    %v543 = vpack.c.b16 %v405, %v403
    %v544 = vpack.c.b16 %v408, %v406
    %v545 = vpack.c.b16 %v409, %v407
    %v546 = vpack.c.b16 %v412, %v410
    %v547 = vpack.c.b16 %v413, %v411
    %v548 = vpack.c.b16 %v416, %v414
    %v549 = vpack.c.b16 %v417, %v415
    %v550 = vpack.c.b16 %v420, %v418
    %v551 = vpack.c.b16 %v421, %v419
    %v552 = vpack.c.b16 %v424, %v422
    %v553 = vpack.c.b16 %v425, %v423
    %v554 = vpack.c.b16 %v428, %v426
    %v555 = vpack.c.b16 %v429, %v427
    %v556 = vpack.c.b16 %v432, %v430
    %v557 = vpack.c.b16 %v433, %v431
    %v558 = vpack.c.b16 %v436, %v434
    %v559 = vpack.c.b16 %v437, %v435
    %v560 = vpack.c.b16 %v440, %v438
    %v561 = vpack.c.b16 %v441, %v439
    %v562 = vpack.c.b16 %v444, %v442
    %v563 = vpack.c.b16 %v445, %v443
    %v564 = vpack.c.b16 %v448, %v446
    %v565 = vpack.c.b16 %v449, %v447
    %v566 = vpack.c.b16 %v452, %v450
    %v567 = vpack.c.b16 %v453, %v451
    %v568 = vpack.c.b16 %v456, %v454
    %v569 = vpack.c.b16 %v457, %v455
    %v570 = vpack.c.b16 %v460, %v458
    %v571 = vpack.c.b16 %v461, %v459
    %v572 = vpack.c.b16 %v464, %v462
    %v573 = vpack.c.b16 %v465, %v463
    %v574 = vpack.c.b16 %v468, %v466
    %v575 = vpack.c.b16 %v469, %v467
    %v576 = vpack.c.b16 %v472, %v470
    %v577 = vpack.c.b16 %v473, %v471
    %v578 = vpack.c.b16 %v476, %v474
    %v579 = vpack.c.b16 %v477, %v475
    %v580 = vpack.c.b16 %v480, %v478
    %v581 = vpack.c.b16 %v481, %v479
    %v582 = vpack.c.b16 %v484, %v482
    %v583 = vpack.c.b16 %v485, %v483
    %v584 = vpack.c.b16 %v488, %v486
    %v585 = vpack.c.b16 %v489, %v487
    %v586 = vpack.c.b16 %v492, %v490
    %v587 = vpack.c.b16 %v493, %v491
    %v588 = vpack.c.b16 %v496, %v494
    %v589 = vpack.c.b16 %v497, %v495
    %v590 = vpack.c.b16 %v500, %v498
    %v591 = vpack.c.b16 %v501, %v499
    %v592 = vpack.c.b16 %v504, %v502
    %v593 = vpack.c.b16 %v505, %v503
    %v594 = vpack.c.b16 %v508, %v506
    %v595 = vpack.c.b16 %v509, %v507
    %v596 = vpack.c.b16 %v512, %v510
    %v597 = vpack.c.b16 %v513, %v511
    %v598 = vpack.c.b16 %v516, %v514
    %v599 = vpack.c.b16 %v517, %v515
    %v600 = vpack.c.b16 %v520, %v518
    %v601 = vpack.c.b16 %v521, %v519
    %v602 = vpack.c.b16 %v524, %v522
    %v603 = vpack.c.b16 %v525, %v523
    %v604 = vpack.c.b16 %v528, %v526
    %v605 = vpack.c.b16 %v529, %v527
    %v606 = vpack.c.b16 %v530, %v530
    %v607 = vpack.c.b16 %v531, %v531
    %vm682 = vcmask 719872
    %v684 = vsel %vm682, %v302, 0
    %vm686 = vcmask 1043456
    %v688 = vsel %vm686, %v606, 0
    %v691 = vsel %vm686, %v607, 0
    %693 = vmatprep.subr.bf16.mxu0 %v533
    %694 = vmatpush1.bf16.msra.mxu0 %v532
    %695 = vmatprep.subr.bf16.mxu0 %v535
    %696 = vmatpush1.bf16.msra.mxu0 %v534
    %697 = vmatprep.subr.bf16.mxu0 %v537
    %698 = vmatpush1.bf16.msra.mxu0 %v536
    %699 = vmatprep.subr.bf16.mxu0 %v539
    %700 = vmatpush1.bf16.msra.mxu0 %v538
    %701 = vmatprep.subr.bf16.mxu0 %v541
    %702 = vmatpush1.bf16.msra.mxu0 %v540
    %703 = vmatprep.subr.bf16.mxu0 %v543
    %704 = vmatpush1.bf16.msra.mxu0 %v542
    %705 = vmatprep.subr.bf16.mxu0 %v545
    %706 = vmatpush1.bf16.msra.mxu0 %v544
    %707 = vmatprep.subr.bf16.mxu0 %v547
    %708 = vmatpush1.bf16.msra.mxu0 %v546
    %709 = vmatprep.subr.bf16.mxu0 %v549
    %710 = vmatpush1.bf16.msra.mxu0 %v548
    %711 = vmatprep.subr.bf16.mxu0 %v551
    %712 = vmatpush1.bf16.msra.mxu0 %v550
    %713 = vmatprep.subr.bf16.mxu0 %v553
    %714 = vmatpush1.bf16.msra.mxu0 %v552
    %715 = vmatprep.subr.bf16.mxu0 %v555
    %716 = vmatpush1.bf16.msra.mxu0 %v554
    %717 = vmatprep.subr.bf16.mxu0 %v557
    %718 = vmatpush1.bf16.msra.mxu0 %v556
    %719 = vmatprep.subr.bf16.mxu0 %v559
    %720 = vmatpush1.bf16.msra.mxu0 %v558
    %721 = vmatprep.subr.bf16.mxu0 %v561
    %722 = vmatpush1.bf16.msra.mxu0 %v560
    %723 = vmatprep.subr.bf16.mxu0 %v563
    %724 = vmatpush1.bf16.msra.mxu0 %v562
    %725 = vmatprep.mubr.bf16.mxu0 %v299
    %726 = vmatmul.mubr.bf16.gmra.mrb[0].mxu0 %v298
    %v727 = vpop.f32.mrb[0].mxu0
    %v728 = vadd.f32 0.0, %v727
    %v729 = vpop.f32.mrb[0].mxu0
    %v730 = vadd.f32 0.0, %v729
    %v731 = vpop.f32.mrb[0].mxu0
    %v732 = vpop.f32.mrb[0].mxu0
    %733 = vdwg.mxu0
    %734 = vmatprep.subr.bf16.mxu0 %v565
    %735 = vmatpush1.bf16.msra.mxu0 %v564
    %736 = vmatprep.subr.bf16.mxu0 %v567
    %737 = vmatpush1.bf16.msra.mxu0 %v566
    %738 = vmatprep.subr.bf16.mxu0 %v569
    %739 = vmatpush1.bf16.msra.mxu0 %v568
    %740 = vmatprep.subr.bf16.mxu0 %v571
    %741 = vmatpush1.bf16.msra.mxu0 %v570
    %742 = vmatprep.subr.bf16.mxu0 %v573
    %743 = vmatpush1.bf16.msra.mxu0 %v572
    %744 = vmatprep.subr.bf16.mxu0 %v575
    %745 = vmatpush1.bf16.msra.mxu0 %v574
    %746 = vmatprep.subr.bf16.mxu0 %v577
    %747 = vmatpush1.bf16.msra.mxu0 %v576
    %748 = vmatprep.subr.bf16.mxu0 %v579
    %749 = vmatpush1.bf16.msra.mxu0 %v578
    %750 = vmatprep.subr.bf16.mxu0 %v581
    %751 = vmatpush1.bf16.msra.mxu0 %v580
    %752 = vmatprep.subr.bf16.mxu0 %v583
    %753 = vmatpush1.bf16.msra.mxu0 %v582
    %754 = vmatprep.subr.bf16.mxu0 %v585
    %755 = vmatpush1.bf16.msra.mxu0 %v584
    %756 = vmatprep.subr.bf16.mxu0 %v587
    %757 = vmatpush1.bf16.msra.mxu0 %v586
    %758 = vmatprep.subr.bf16.mxu0 %v589
    %759 = vmatpush1.bf16.msra.mxu0 %v588
    %760 = vmatprep.subr.bf16.mxu0 %v591
    %761 = vmatpush1.bf16.msra.mxu0 %v590
    %762 = vmatprep.subr.bf16.mxu0 %v593
    %763 = vmatpush1.bf16.msra.mxu0 %v592
    %764 = vmatprep.subr.bf16.mxu0 %v595
    %765 = vmatpush1.bf16.msra.mxu0 %v594
    %766 = vmatprep.mubr.bf16.mxu0 %v301
    %767 = vmatmul.mubr.bf16.gmra.mrb[0].mxu0 %v300
    %v768 = vpop.f32.mrb[0].mxu0
    %v769 = vadd.f32 %v728, %v768
    %v770 = vpop.f32.mrb[0].mxu0
    %v771 = vadd.f32 %v730, %v770
    %v772 = vpop.f32.mrb[0].mxu0
    %v773 = vpop.f32.mrb[0].mxu0
    %774 = vdwg.mxu0
    %775 = vmatprep.subr.bf16.mxu0 %v597
    %776 = vmatpush1.bf16.msra.mxu0 %v596
    %777 = vmatprep.subr.bf16.mxu0 %v599
    %778 = vmatpush1.bf16.msra.mxu0 %v598
    %779 = vmatprep.subr.bf16.mxu0 %v601
    %780 = vmatpush1.bf16.msra.mxu0 %v600
    %781 = vmatprep.subr.bf16.mxu0 %v603
    %782 = vmatpush1.bf16.msra.mxu0 %v602
    %783 = vmatprep.subr.bf16.mxu0 %v605
    %784 = vmatpush1.bf16.msra.mxu0 %v604
    %785 = vmatprep.subr.bf16.mxu0 %v691
    %786 = vmatpush1.bf16.msra.mxu0 %v688
    %787 = vmatprep.subr.bf16.mxu0 0
    %788 = vmatpush1.bf16.msra.mxu0 0
    %789 = vmatprep.subr.bf16.mxu0 0
    %790 = vmatpush1.bf16.msra.mxu0 0
    %791 = vmatprep.subr.bf16.mxu0 0
    %792 = vmatpush1.bf16.msra.mxu0 0
    %793 = vmatprep.subr.bf16.mxu0 0
    %794 = vmatpush1.bf16.msra.mxu0 0
    %795 = vmatprep.subr.bf16.mxu0 0
    %796 = vmatpush1.bf16.msra.mxu0 0
    %797 = vmatprep.subr.bf16.mxu0 0
    %798 = vmatpush1.bf16.msra.mxu0 0
    %799 = vmatprep.subr.bf16.mxu0 0
    %800 = vmatpush1.bf16.msra.mxu0 0
    %801 = vmatprep.subr.bf16.mxu0 0
    %802 = vmatpush1.bf16.msra.mxu0 0
    %803 = vmatprep.subr.bf16.mxu0 0
    %804 = vmatpush1.bf16.msra.mxu0 0
    %805 = vmatprep.subr.bf16.mxu0 0
    %806 = vmatpush1.bf16.msra.mxu0 0
    %807 = vmatprep.mubr.bf16.mxu0 0
    %808 = vmatmul.mubr.bf16.gmra.mrb[0].mxu0 %v684
    %v809 = vpop.f32.mrb[0].mxu0
    %v810 = vadd.f32 %v769, %v809
    %v811 = vpop.f32.mrb[0].mxu0
    %v812 = vadd.f32 %v771, %v811
    %v813 = vpop.f32.mrb[0].mxu0
    %v814 = vpop.f32.mrb[0].mxu0
    %815 = vdwg.mxu0
    %v819 = vunpack.c.l.b16 %v134
    %v820 = vunpack.c.h.b16 %v134
    %v821 = vunpack.c.l.b16 %v135
    %v822 = vunpack.c.h.b16 %v135
    %v823 = vunpack.c.l.b16 %v136
    %v824 = vpack.c.b16 %v819, %v819
    %v825 = vpack.c.b16 %v820, %v820
    %v826 = vpack.c.b16 %v821, %v821
    %v827 = vpack.c.b16 %v822, %v822
    %v828 = vpack.c.b16 %v823, %v823
    %v908 = vunpack.c.l.b16 %v137
    %v909 = vunpack.c.h.b16 %v137
    %v910 = vunpack.c.l.b16 %v138
    %v911 = vunpack.c.h.b16 %v138
    %v912 = vunpack.c.l.b16 %v139
    %v913 = vunpack.c.h.b16 %v139
    %v914 = vunpack.c.l.b16 %v140
    %v915 = vunpack.c.h.b16 %v140
    %v916 = vunpack.c.l.b16 %v141
    %v917 = vunpack.c.h.b16 %v141
    %v918 = vunpack.c.l.b16 %v142
    %v919 = vunpack.c.h.b16 %v142
    %v920 = vunpack.c.l.b16 %v143
    %v921 = vunpack.c.h.b16 %v143
    %v922 = vunpack.c.l.b16 %v144
    %v923 = vunpack.c.h.b16 %v144
    %v924 = vunpack.c.l.b16 %v145
    %v925 = vunpack.c.h.b16 %v145
    %v926 = vunpack.c.l.b16 %v146
    %v927 = vunpack.c.h.b16 %v146
    %v928 = vunpack.c.l.b16 %v147
    %v929 = vunpack.c.h.b16 %v147
    %v930 = vunpack.c.l.b16 %v148
    %v931 = vunpack.c.h.b16 %v148
    %v932 = vunpack.c.l.b16 %v149
    %v933 = vunpack.c.h.b16 %v149
    %v934 = vunpack.c.l.b16 %v150
    %v935 = vunpack.c.h.b16 %v150
    %v936 = vunpack.c.l.b16 %v151
    %v937 = vunpack.c.h.b16 %v151
    %v938 = vunpack.c.l.b16 %v152
    %v939 = vunpack.c.h.b16 %v152
    %v940 = vunpack.c.l.b16 %v153
    %v941 = vunpack.c.h.b16 %v153
    %v942 = vunpack.c.l.b16 %v154
    %v943 = vunpack.c.h.b16 %v154
    %v944 = vunpack.c.l.b16 %v155
    %v945 = vunpack.c.h.b16 %v155
    %v946 = vunpack.c.l.b16 %v156
    %v947 = vunpack.c.h.b16 %v156
    %v948 = vunpack.c.l.b16 %v157
    %v949 = vunpack.c.h.b16 %v157
    %v950 = vunpack.c.l.b16 %v158
    %v951 = vunpack.c.h.b16 %v158
    %v952 = vunpack.c.l.b16 %v159
    %v953 = vunpack.c.h.b16 %v159
    %v954 = vunpack.c.l.b16 %v160
    %v955 = vunpack.c.h.b16 %v160
    %v956 = vunpack.c.l.b16 %v161
    %v957 = vunpack.c.h.b16 %v161
    %v958 = vunpack.c.l.b16 %v162
    %v959 = vunpack.c.h.b16 %v162
    %v960 = vunpack.c.l.b16 %v163
    %v961 = vunpack.c.h.b16 %v163
    %v962 = vunpack.c.l.b16 %v164
    %v963 = vunpack.c.h.b16 %v164
    %v964 = vunpack.c.l.b16 %v165
    %v965 = vunpack.c.h.b16 %v165
    %v966 = vunpack.c.l.b16 %v166
    %v967 = vunpack.c.h.b16 %v166
    %v968 = vunpack.c.l.b16 %v167
    %v969 = vunpack.c.h.b16 %v167
    %v970 = vunpack.c.l.b16 %v168
    %v971 = vunpack.c.h.b16 %v168
    %v972 = vunpack.c.l.b16 %v169
    %v973 = vunpack.c.h.b16 %v169
    %v974 = vunpack.c.l.b16 %v170
    %v975 = vunpack.c.h.b16 %v170
    %v976 = vunpack.c.l.b16 %v171
    %v977 = vunpack.c.h.b16 %v171
    %v978 = vunpack.c.l.b16 %v172
    %v979 = vunpack.c.h.b16 %v172
    %v980 = vunpack.c.l.b16 %v173
    %v981 = vunpack.c.h.b16 %v173
    %v982 = vunpack.c.l.b16 %v174
    %v983 = vunpack.c.h.b16 %v174
    %v984 = vunpack.c.l.b16 %v175
    %v985 = vunpack.c.h.b16 %v175
    %v986 = vunpack.c.l.b16 %v176
    %v987 = vunpack.c.h.b16 %v176
    %v988 = vunpack.c.l.b16 %v177
    %v989 = vunpack.c.h.b16 %v177
    %v990 = vunpack.c.l.b16 %v178
    %v991 = vunpack.c.h.b16 %v178
    %v992 = vunpack.c.l.b16 %v179
    %v993 = vunpack.c.h.b16 %v179
    %v994 = vunpack.c.l.b16 %v180
    %v995 = vunpack.c.h.b16 %v180
    %v996 = vunpack.c.l.b16 %v181
    %v997 = vunpack.c.h.b16 %v181
    %v998 = vunpack.c.l.b16 %v182
    %v999 = vunpack.c.h.b16 %v182
    %v1000 = vunpack.c.l.b16 %v183
    %v1001 = vunpack.c.h.b16 %v183
    %v1002 = vunpack.c.l.b16 %v184
    %v1003 = vunpack.c.h.b16 %v184
    %v1004 = vunpack.c.l.b16 %v185
    %v1005 = vunpack.c.h.b16 %v185
    %v1006 = vunpack.c.l.b16 %v186
    %v1007 = vunpack.c.h.b16 %v186
    %v1008 = vunpack.c.l.b16 %v187
    %v1009 = vunpack.c.h.b16 %v187
    %v1010 = vunpack.c.l.b16 %v188
    %v1011 = vunpack.c.h.b16 %v188
    %v1012 = vunpack.c.l.b16 %v189
    %v1013 = vunpack.c.h.b16 %v189
    %v1014 = vunpack.c.l.b16 %v190
    %v1015 = vunpack.c.h.b16 %v190
    %v1016 = vunpack.c.l.b16 %v191
    %v1017 = vunpack.c.h.b16 %v191
    %v1018 = vunpack.c.l.b16 %v192
    %v1019 = vunpack.c.h.b16 %v192
    %v1020 = vunpack.c.l.b16 %v193
    %v1021 = vunpack.c.h.b16 %v193
    %v1022 = vunpack.c.l.b16 %v194
    %v1023 = vunpack.c.h.b16 %v194
    %v1024 = vunpack.c.l.b16 %v195
    %v1025 = vunpack.c.h.b16 %v195
    %v1026 = vunpack.c.l.b16 %v196
    %v1027 = vunpack.c.h.b16 %v196
    %v1028 = vunpack.c.l.b16 %v197
    %v1029 = vunpack.c.h.b16 %v197
    %v1030 = vunpack.c.l.b16 %v198
    %v1031 = vunpack.c.h.b16 %v198
    %v1032 = vunpack.c.l.b16 %v199
    %v1033 = vunpack.c.h.b16 %v199
    %v1034 = vunpack.c.l.b16 %v200
    %v1035 = vunpack.c.h.b16 %v200
    %v1036 = vunpack.c.l.b16 %v201
    %v1037 = vunpack.c.h.b16 %v201
    %v1038 = vunpack.c.l.b16 %v202
    %v1039 = vunpack.c.h.b16 %v202
    %v1040 = vunpack.c.l.b16 %v203
    %v1041 = vunpack.c.h.b16 %v203
    %v1042 = vunpack.c.l.b16 %v204
    %v1043 = vunpack.c.h.b16 %v204
    %v1044 = vunpack.c.l.b16 %v205
    %v1045 = vunpack.c.h.b16 %v205
    %v1046 = vunpack.c.l.b16 %v206
    %v1047 = vunpack.c.h.b16 %v206
    %v1048 = vunpack.c.l.b16 %v207
    %v1049 = vunpack.c.h.b16 %v207
    %v1050 = vunpack.c.l.b16 %v208
    %v1051 = vunpack.c.h.b16 %v208
    %v1052 = vunpack.c.l.b16 %v209
    %v1053 = vunpack.c.h.b16 %v209
    %v1054 = vunpack.c.l.b16 %v210
    %v1055 = vunpack.c.h.b16 %v210
    %v1056 = vunpack.c.l.b16 %v211
    %v1057 = vunpack.c.h.b16 %v211
    %v1058 = vpack.c.b16 %v910, %v908
    %v1059 = vpack.c.b16 %v911, %v909
    %v1060 = vpack.c.b16 %v914, %v912
    %v1061 = vpack.c.b16 %v915, %v913
    %v1062 = vpack.c.b16 %v918, %v916
    %v1063 = vpack.c.b16 %v919, %v917
    %v1064 = vpack.c.b16 %v922, %v920
    %v1065 = vpack.c.b16 %v923, %v921
    %v1066 = vpack.c.b16 %v926, %v924
    %v1067 = vpack.c.b16 %v927, %v925
    %v1068 = vpack.c.b16 %v930, %v928
    %v1069 = vpack.c.b16 %v931, %v929
    %v1070 = vpack.c.b16 %v934, %v932
    %v1071 = vpack.c.b16 %v935, %v933
    %v1072 = vpack.c.b16 %v938, %v936
    %v1073 = vpack.c.b16 %v939, %v937
    %v1074 = vpack.c.b16 %v942, %v940
    %v1075 = vpack.c.b16 %v943, %v941
    %v1076 = vpack.c.b16 %v946, %v944
    %v1077 = vpack.c.b16 %v947, %v945
    %v1078 = vpack.c.b16 %v950, %v948
    %v1079 = vpack.c.b16 %v951, %v949
    %v1080 = vpack.c.b16 %v954, %v952
    %v1081 = vpack.c.b16 %v955, %v953
    %v1082 = vpack.c.b16 %v958, %v956
    %v1083 = vpack.c.b16 %v959, %v957
    %v1084 = vpack.c.b16 %v962, %v960
    %v1085 = vpack.c.b16 %v963, %v961
    %v1086 = vpack.c.b16 %v966, %v964
    %v1087 = vpack.c.b16 %v967, %v965
    %v1088 = vpack.c.b16 %v970, %v968
    %v1089 = vpack.c.b16 %v971, %v969
    %v1090 = vpack.c.b16 %v974, %v972
    %v1091 = vpack.c.b16 %v975, %v973
    %v1092 = vpack.c.b16 %v978, %v976
    %v1093 = vpack.c.b16 %v979, %v977
    %v1094 = vpack.c.b16 %v982, %v980
    %v1095 = vpack.c.b16 %v983, %v981
    %v1096 = vpack.c.b16 %v986, %v984
    %v1097 = vpack.c.b16 %v987, %v985
    %v1098 = vpack.c.b16 %v990, %v988
    %v1099 = vpack.c.b16 %v991, %v989
    %v1100 = vpack.c.b16 %v994, %v992
    %v1101 = vpack.c.b16 %v995, %v993
    %v1102 = vpack.c.b16 %v998, %v996
    %v1103 = vpack.c.b16 %v999, %v997
    %v1104 = vpack.c.b16 %v1002, %v1000
    %v1105 = vpack.c.b16 %v1003, %v1001
    %v1106 = vpack.c.b16 %v1006, %v1004
    %v1107 = vpack.c.b16 %v1007, %v1005
    %v1108 = vpack.c.b16 %v1010, %v1008
    %v1109 = vpack.c.b16 %v1011, %v1009
    %v1110 = vpack.c.b16 %v1014, %v1012
    %v1111 = vpack.c.b16 %v1015, %v1013
    %v1112 = vpack.c.b16 %v1018, %v1016
    %v1113 = vpack.c.b16 %v1019, %v1017
    %v1114 = vpack.c.b16 %v1022, %v1020
    %v1115 = vpack.c.b16 %v1023, %v1021
    %v1116 = vpack.c.b16 %v1026, %v1024
    %v1117 = vpack.c.b16 %v1027, %v1025
    %v1118 = vpack.c.b16 %v1030, %v1028
    %v1119 = vpack.c.b16 %v1031, %v1029
    %v1120 = vpack.c.b16 %v1034, %v1032
    %v1121 = vpack.c.b16 %v1035, %v1033
    %v1122 = vpack.c.b16 %v1038, %v1036
    %v1123 = vpack.c.b16 %v1039, %v1037
    %v1124 = vpack.c.b16 %v1042, %v1040
    %v1125 = vpack.c.b16 %v1043, %v1041
    %v1126 = vpack.c.b16 %v1046, %v1044
    %v1127 = vpack.c.b16 %v1047, %v1045
    %v1128 = vpack.c.b16 %v1050, %v1048
    %v1129 = vpack.c.b16 %v1051, %v1049
    %v1130 = vpack.c.b16 %v1054, %v1052
    %v1131 = vpack.c.b16 %v1055, %v1053
    %v1132 = vpack.c.b16 %v1056, %v1056
    %v1133 = vpack.c.b16 %v1057, %v1057
    %v1209 = vsel %vm682, %v828, 0
    %v1212 = vsel %vm686, %v1132, 0
    %v1215 = vsel %vm686, %v1133, 0
    %1217 = vmatprep.subr.bf16.mxu0 %v1059
    %1218 = vmatpush1.bf16.msra.mxu0 %v1058
    %1219 = vmatprep.subr.bf16.mxu0 %v1061
    %1220 = vmatpush1.bf16.msra.mxu0 %v1060
    %1221 = vmatprep.subr.bf16.mxu0 %v1063
    %1222 = vmatpush1.bf16.msra.mxu0 %v1062
    %1223 = vmatprep.subr.bf16.mxu0 %v1065
    %1224 = vmatpush1.bf16.msra.mxu0 %v1064
    %1225 = vmatprep.subr.bf16.mxu0 %v1067
    %1226 = vmatpush1.bf16.msra.mxu0 %v1066
    %1227 = vmatprep.subr.bf16.mxu0 %v1069
    %1228 = vmatpush1.bf16.msra.mxu0 %v1068
    %1229 = vmatprep.subr.bf16.mxu0 %v1071
    %1230 = vmatpush1.bf16.msra.mxu0 %v1070
    %1231 = vmatprep.subr.bf16.mxu0 %v1073
    %1232 = vmatpush1.bf16.msra.mxu0 %v1072
    %1233 = vmatprep.subr.bf16.mxu0 %v1075
    %1234 = vmatpush1.bf16.msra.mxu0 %v1074
    %1235 = vmatprep.subr.bf16.mxu0 %v1077
    %1236 = vmatpush1.bf16.msra.mxu0 %v1076
    %1237 = vmatprep.subr.bf16.mxu0 %v1079
    %1238 = vmatpush1.bf16.msra.mxu0 %v1078
    %1239 = vmatprep.subr.bf16.mxu0 %v1081
    %1240 = vmatpush1.bf16.msra.mxu0 %v1080
    %1241 = vmatprep.subr.bf16.mxu0 %v1083
    %1242 = vmatpush1.bf16.msra.mxu0 %v1082
    %1243 = vmatprep.subr.bf16.mxu0 %v1085
    %1244 = vmatpush1.bf16.msra.mxu0 %v1084
    %1245 = vmatprep.subr.bf16.mxu0 %v1087
    %1246 = vmatpush1.bf16.msra.mxu0 %v1086
    %1247 = vmatprep.subr.bf16.mxu0 %v1089
    %1248 = vmatpush1.bf16.msra.mxu0 %v1088
    %1249 = vmatprep.mubr.bf16.mxu0 %v825
    %1250 = vmatmul.mubr.bf16.gmra.mrb[0].mxu0 %v824
    %v1251 = vpop.f32.mrb[0].mxu0
    %v1252 = vadd.f32 %v810, %v1251
    %v1253 = vpop.f32.mrb[0].mxu0
    %v1254 = vadd.f32 %v812, %v1253
    %v1255 = vpop.f32.mrb[0].mxu0
    %v1256 = vpop.f32.mrb[0].mxu0
    %1257 = vdwg.mxu0
    %1258 = vmatprep.subr.bf16.mxu0 %v1091
    %1259 = vmatpush1.bf16.msra.mxu0 %v1090
    %1260 = vmatprep.subr.bf16.mxu0 %v1093
    %1261 = vmatpush1.bf16.msra.mxu0 %v1092
    %1262 = vmatprep.subr.bf16.mxu0 %v1095
    %1263 = vmatpush1.bf16.msra.mxu0 %v1094
    %1264 = vmatprep.subr.bf16.mxu0 %v1097
    %1265 = vmatpush1.bf16.msra.mxu0 %v1096
    %1266 = vmatprep.subr.bf16.mxu0 %v1099
    %1267 = vmatpush1.bf16.msra.mxu0 %v1098
    %1268 = vmatprep.subr.bf16.mxu0 %v1101
    %1269 = vmatpush1.bf16.msra.mxu0 %v1100
    %1270 = vmatprep.subr.bf16.mxu0 %v1103
    %1271 = vmatpush1.bf16.msra.mxu0 %v1102
    %1272 = vmatprep.subr.bf16.mxu0 %v1105
    %1273 = vmatpush1.bf16.msra.mxu0 %v1104
    %1274 = vmatprep.subr.bf16.mxu0 %v1107
    %1275 = vmatpush1.bf16.msra.mxu0 %v1106
    %1276 = vmatprep.subr.bf16.mxu0 %v1109
    %1277 = vmatpush1.bf16.msra.mxu0 %v1108
    %1278 = vmatprep.subr.bf16.mxu0 %v1111
    %1279 = vmatpush1.bf16.msra.mxu0 %v1110
    %1280 = vmatprep.subr.bf16.mxu0 %v1113
    %1281 = vmatpush1.bf16.msra.mxu0 %v1112
    %1282 = vmatprep.subr.bf16.mxu0 %v1115
    %1283 = vmatpush1.bf16.msra.mxu0 %v1114
    %1284 = vmatprep.subr.bf16.mxu0 %v1117
    %1285 = vmatpush1.bf16.msra.mxu0 %v1116
    %1286 = vmatprep.subr.bf16.mxu0 %v1119
    %1287 = vmatpush1.bf16.msra.mxu0 %v1118
    %1288 = vmatprep.subr.bf16.mxu0 %v1121
    %1289 = vmatpush1.bf16.msra.mxu0 %v1120
    %1290 = vmatprep.mubr.bf16.mxu0 %v827
    %1291 = vmatmul.mubr.bf16.gmra.mrb[0].mxu0 %v826
    %v1292 = vpop.f32.mrb[0].mxu0
    %v1293 = vadd.f32 %v1252, %v1292
    %v1294 = vpop.f32.mrb[0].mxu0
    %v1295 = vadd.f32 %v1254, %v1294
    %v1296 = vpop.f32.mrb[0].mxu0
    %v1297 = vpop.f32.mrb[0].mxu0
    %1298 = vdwg.mxu0
    %1299 = vmatprep.subr.bf16.mxu0 %v1123
    %1300 = vmatpush1.bf16.msra.mxu0 %v1122
    %1301 = vmatprep.subr.bf16.mxu0 %v1125
    %1302 = vmatpush1.bf16.msra.mxu0 %v1124
    %1303 = vmatprep.subr.bf16.mxu0 %v1127
    %1304 = vmatpush1.bf16.msra.mxu0 %v1126
    %1305 = vmatprep.subr.bf16.mxu0 %v1129
    %1306 = vmatpush1.bf16.msra.mxu0 %v1128
    %1307 = vmatprep.subr.bf16.mxu0 %v1131
    %1308 = vmatpush1.bf16.msra.mxu0 %v1130
    %1309 = vmatprep.subr.bf16.mxu0 %v1215
    %1310 = vmatpush1.bf16.msra.mxu0 %v1212
    %1311 = vmatprep.subr.bf16.mxu0 0
    %1312 = vmatpush1.bf16.msra.mxu0 0
    %1313 = vmatprep.subr.bf16.mxu0 0
    %1314 = vmatpush1.bf16.msra.mxu0 0
    %1315 = vmatprep.subr.bf16.mxu0 0
    %1316 = vmatpush1.bf16.msra.mxu0 0
    %1317 = vmatprep.subr.bf16.mxu0 0
    %1318 = vmatpush1.bf16.msra.mxu0 0
    %1319 = vmatprep.subr.bf16.mxu0 0
    %1320 = vmatpush1.bf16.msra.mxu0 0
    %1321 = vmatprep.subr.bf16.mxu0 0
    %1322 = vmatpush1.bf16.msra.mxu0 0
    %1323 = vmatprep.subr.bf16.mxu0 0
    %1324 = vmatpush1.bf16.msra.mxu0 0
    %1325 = vmatprep.subr.bf16.mxu0 0
    %1326 = vmatpush1.bf16.msra.mxu0 0
    %1327 = vmatprep.subr.bf16.mxu0 0
    %1328 = vmatpush1.bf16.msra.mxu0 0
    %1329 = vmatprep.subr.bf16.mxu0 0
    %1330 = vmatpush1.bf16.msra.mxu0 0
    %1331 = vmatprep.mubr.bf16.mxu0 0
    %1332 = vmatmul.mubr.bf16.gmra.mrb[0].mxu0 %v1209
    %v1333 = vpop.f32.mrb[0].mxu0
    %v1334 = vadd.f32 %v1293, %v1333
    %v1335 = vpop.f32.mrb[0].mxu0
    %v1336 = vadd.f32 %v1295, %v1335
    %v1337 = vpop.f32.mrb[0].mxu0
    %v1338 = vpop.f32.mrb[0].mxu0
    %1339 = vdwg.mxu0
    %v1340 = vld [vmem:[#allocation11] sm:$0x3]
    %v1342 = vlaneseq
    %v1343 = vshrl.u32 %v1342, 7
    %v1344 = vsub.s32 0, %v1343
    %v1345 = vrot.slane %v1340, %v1344
    %v1346 = vlaneseq
    %v1347 = vshrl.u32 %v1346, 7
    %v1348 = vsub.s32 1, %v1347
    %v1349 = vrot.slane %v1340, %v1348
    %v1352 = vadd.f32 %v1334, %v1345
    %v1353 = vadd.f32 %v1336, %v1349
    %v1354 = vld [vmem:[#allocation12] sm:$0xf]
    %v1355 = vld [vmem:[#allocation12 + $0x4] sm:$0xf]
    %v1356 = vld [vmem:[#allocation12 + $0x8] sm:$0xf]
    %v1357 = vld [vmem:[#allocation12 + $0xc] sm:$0xf]
    %v1358 = vld [vmem:[#allocation12 + $0x10] sm:$0xf]
    %v1359 = vld [vmem:[#allocation12 + $0x14] sm:$0xf]
    %v1360 = vld [vmem:[#allocation12 + $0x18] sm:$0xf]
    %v1361 = vld [vmem:[#allocation12 + $0x1c] sm:$0xf]
    %v1362 = vld [vmem:[#allocation12 + $0x20] sm:$0xf]
    %v1363 = vld [vmem:[#allocation12 + $0x24] sm:$0xf]
    %v1364 = vld [vmem:[#allocation12 + $0x28] sm:$0xf]
    %v1365 = vld [vmem:[#allocation12 + $0x2c] sm:$0xf]
    %v1366 = vld [vmem:[#allocation12 + $0x30] sm:$0xf]
    %v1367 = vld [vmem:[#allocation12 + $0x34] sm:$0xf]
    %v1368 = vld [vmem:[#allocation12 + $0x38] sm:$0xf]
    %v1369 = vld [vmem:[#allocation12 + $0x3c] sm:$0xf]
    %v1370 = vld [vmem:[#allocation12 + $0x40] sm:$0xf]
    %v1371 = vld [vmem:[#allocation12 + $0x44] sm:$0xf]
    %v1372 = vld [vmem:[#allocation12 + $0x48] sm:$0xf]
    %v1373 = vld [vmem:[#allocation12 + $0x4c] sm:$0xf]
    %v1374 = vld [vmem:[#allocation12 + $0x50] sm:$0xf]
    %v1375 = vld [vmem:[#allocation12 + $0x54] sm:$0xf]
    %v1376 = vld [vmem:[#allocation12 + $0x58] sm:$0xf]
    %v1377 = vld [vmem:[#allocation12 + $0x5c] sm:$0xf]
    %v1378 = vld [vmem:[#allocation12 + $0x60] sm:$0xf]
    %v1379 = vld [vmem:[#allocation12 + $0x64] sm:$0xf]
    %v1380 = vld [vmem:[#allocation12 + $0x68] sm:$0xf]
    %v1381 = vld [vmem:[#allocation12 + $0x6c] sm:$0xf]
    %v1382 = vld [vmem:[#allocation12 + $0x70] sm:$0xf]
    %v1383 = vld [vmem:[#allocation12 + $0x74] sm:$0xf]
    %v1384 = vld [vmem:[#allocation12 + $0x78] sm:$0xf]
    %v1385 = vld [vmem:[#allocation12 + $0x7c] sm:$0xf]
    %v1386 = vld [vmem:[#allocation14] sm:$0x1]
    %v1387 = vld [vmem:[#allocation15] sm:$0x1]
    %s1388 = sld [smem:[#allocation2]]
    %v1389 = vmax.f32 %v1352, 0.0
    %v1390 = vmax.f32 %v1353, 0.0
    %v1391 = vpack.c.bf16 %v1389, %v1389
    %v1392 = vpack.c.bf16 %v1390, %v1390
    %v1394 = vlaneseq
    %v1395 = vshrl.u32 %v1394, 7
    %v1396 = vsub.s32 0, %v1395
    %v1397 = vrot.slane %v1386, %v1396
    %v1431 = vunpack.c.l.b16 %v1354
    %v1432 = vunpack.c.l.b16 %v1355
    %v1433 = vunpack.c.l.b16 %v1356
    %v1434 = vunpack.c.l.b16 %v1357
    %v1435 = vunpack.c.l.b16 %v1358
    %v1436 = vunpack.c.l.b16 %v1359
    %v1437 = vunpack.c.l.b16 %v1360
    %v1438 = vunpack.c.l.b16 %v1361
    %v1439 = vunpack.c.l.b16 %v1362
    %v1440 = vunpack.c.l.b16 %v1363
    %v1441 = vunpack.c.l.b16 %v1364
    %v1442 = vunpack.c.l.b16 %v1365
    %v1443 = vunpack.c.l.b16 %v1366
    %v1444 = vunpack.c.l.b16 %v1367
    %v1445 = vunpack.c.l.b16 %v1368
    %v1446 = vunpack.c.l.b16 %v1369
    %v1447 = vunpack.c.l.b16 %v1370
    %v1448 = vunpack.c.l.b16 %v1371
    %v1449 = vunpack.c.l.b16 %v1372
    %v1450 = vunpack.c.l.b16 %v1373
    %v1451 = vunpack.c.l.b16 %v1374
    %v1452 = vunpack.c.l.b16 %v1375
    %v1453 = vunpack.c.l.b16 %v1376
    %v1454 = vunpack.c.l.b16 %v1377
    %v1455 = vunpack.c.l.b16 %v1378
    %v1456 = vunpack.c.l.b16 %v1379
    %v1457 = vunpack.c.l.b16 %v1380
    %v1458 = vunpack.c.l.b16 %v1381
    %v1459 = vunpack.c.l.b16 %v1382
    %v1460 = vunpack.c.l.b16 %v1383
    %v1461 = vunpack.c.l.b16 %v1384
    %v1462 = vunpack.c.l.b16 %v1385
    %v1463 = vpack.c.b16 %v1432, %v1431
    %v1464 = vpack.c.b16 %v1434, %v1433
    %v1465 = vpack.c.b16 %v1436, %v1435
    %v1466 = vpack.c.b16 %v1438, %v1437
    %v1467 = vpack.c.b16 %v1440, %v1439
    %v1468 = vpack.c.b16 %v1442, %v1441
    %v1469 = vpack.c.b16 %v1444, %v1443
    %v1470 = vpack.c.b16 %v1446, %v1445
    %v1471 = vpack.c.b16 %v1448, %v1447
    %v1472 = vpack.c.b16 %v1450, %v1449
    %v1473 = vpack.c.b16 %v1452, %v1451
    %v1474 = vpack.c.b16 %v1454, %v1453
    %v1475 = vpack.c.b16 %v1456, %v1455
    %v1476 = vpack.c.b16 %v1458, %v1457
    %v1477 = vpack.c.b16 %v1460, %v1459
    %v1478 = vpack.c.b16 %v1462, %v1461
    %1495 = vmatprep.subr.bf16.mxu0 0
    %1496 = vmatpush1.bf16.msra.mxu0 %v1463
    %1497 = vmatprep.subr.bf16.mxu0 0
    %1498 = vmatpush1.bf16.msra.mxu0 %v1464
    %1499 = vmatprep.subr.bf16.mxu0 0
    %1500 = vmatpush1.bf16.msra.mxu0 %v1465
    %1501 = vmatprep.subr.bf16.mxu0 0
    %1502 = vmatpush1.bf16.msra.mxu0 %v1466
    %1503 = vmatprep.subr.bf16.mxu0 0
    %1504 = vmatpush1.bf16.msra.mxu0 %v1467
    %1505 = vmatprep.subr.bf16.mxu0 0
    %1506 = vmatpush1.bf16.msra.mxu0 %v1468
    %1507 = vmatprep.subr.bf16.mxu0 0
    %1508 = vmatpush1.bf16.msra.mxu0 %v1469
    %1509 = vmatprep.subr.bf16.mxu0 0
    %1510 = vmatpush1.bf16.msra.mxu0 %v1470
    %1511 = vmatprep.subr.bf16.mxu0 0
    %1512 = vmatpush1.bf16.msra.mxu0 %v1471
    %1513 = vmatprep.subr.bf16.mxu0 0
    %1514 = vmatpush1.bf16.msra.mxu0 %v1472
    %1515 = vmatprep.subr.bf16.mxu0 0
    %1516 = vmatpush1.bf16.msra.mxu0 %v1473
    %1517 = vmatprep.subr.bf16.mxu0 0
    %1518 = vmatpush1.bf16.msra.mxu0 %v1474
    %1519 = vmatprep.subr.bf16.mxu0 0
    %1520 = vmatpush1.bf16.msra.mxu0 %v1475
    %1521 = vmatprep.subr.bf16.mxu0 0
    %1522 = vmatpush1.bf16.msra.mxu0 %v1476
    %1523 = vmatprep.subr.bf16.mxu0 0
    %1524 = vmatpush1.bf16.msra.mxu0 %v1477
    %1525 = vmatprep.subr.bf16.mxu0 0
    %1526 = vmatpush1.bf16.msra.mxu0 %v1478
    %1527 = vmatprep.mubr.bf16.mxu0 %v1392
    %1528 = vmatmul.mubr.bf16.gmra.mrb[0].mxu0 %v1391
    %v1529 = vpop.f32.mrb[0].mxu0
    %v1530 = vadd.f32 %v1397, %v1529
    %v1531 = vpop.f32.mrb[0].mxu0
    %v1532 = vpop.f32.mrb[0].mxu0
    %v1533 = vpop.f32.mrb[0].mxu0
    %1534 = vdwg.mxu0
    %v1535 = vmax.f32 %v1530, 0.0
    %v1537 = vlaneseq
    %v1538 = vshrl.u32 %v1537, 7
    %v1539 = vsub.s32 0, %v1538
    %v1540 = vrot.slane %v1387, %v1539
    %v1542 = vmul.f32 %v1535, %v1540
    %vm1543 = vcmask 523264
    %v1544 = vsel %vm1543, %v1542, 0.0
    %1545 = vadd.xlane.f32.xlu0 %v1544
    %v1546 = vpop.xlane.xlu0 %1545
    %v1547 = vstv %s1388
    %v1548 = vadd.f32 %v1546, %v1547
    %v1549 = vtanh.pop %v1548
    %vm1550 = vcmask 7168
    %1551 = vst.msk [vmem:[#allocation17] sm:$0xff] %vm1550, %v1549
    // Predicated region
    $region70: #{ranknet_forward.1} parent=1 // pred_check
      _
    $region71: #{ranknet_forward.1} parent=1 // pred_check_branch
      %1553 = sbr.rel (0) target = $region73
    $region72: #{ranknet_forward.1} parent=1 // pred_region
      %s1555 = ssub.s32 128, 128
      %1556 = vsyncadd [#allocation5], %s1555
      %s1558 = sshll.u32 [#allocation17], 4
      %s1559 = int_to_ptr.vmem [resolvable:$true] %s1558
      %1561 = dma.vmem_to_hbm [thread:$0]  %s1559, 128, %s9, [#allocation5]
    $region73: #{ranknet_forward.1} parent=1 // pred_fallthru
      _
    // Predicated region
    $region74: #{ranknet_forward.1} parent=1 // pred_check
      _
    $region75: #{ranknet_forward.1} parent=1 // pred_check_branch
      %1563 = sbr.rel (0) target = $region77
    $region76: #{ranknet_forward.1} parent=1 // pred_region
      %1564 = dma.done [#allocation5], 128
    $region77: #{ranknet_forward.1} parent=1 // pred_fallthru
      _
    %1565 = vsyncpa [#allocation4], 1
    %1566 = vsyncpa [#allocation7], 1
    %1567 = vsyncpa [#allocation10], 1
    %1568 = vsyncpa [#allocation13], 1
    %1569 = vsyncpa [#allocation16], 1
    %1570 = vsyncpa [#allocation5], 1

</llo_original>
